<compile_context>
chip_gen: v6e
topology: v6e:2x2x1
jax: 0.10.0
libtpu: 0.0.40
codegen_flags: <defaults>
</compile_context>

<pallas_src>
import functools

import jax
import jax.numpy as jnp
import numpy as np
from jax import lax
from jax.experimental import pallas as pl
from jax.experimental.pallas import tpu as pltpu


def _block_kernel(x_ref, w1_ref, b1_ref, w2_ref, b2_ref, w3sc_ref, b3sc_ref,
                  out_ref, pad_ref, *, Nb, H, W, Cin, Cmid, Cout, stride,
                  has_proj):
    Ho = (H + 2 - 3) // stride + 1
    Wo = (W + 2 - 3) // stride + 1

    x = x_ref[...].astype(jnp.float32)                     # (Nb, H, W, Cin)

    # --- conv1 (1x1, BN scale pre-folded) + bias + relu ----------------------
    h1 = jnp.dot(x.reshape(Nb * H * W, Cin), w1_ref[...],
                 preferred_element_type=jnp.float32)
    h1 = jnp.maximum(h1 + b1_ref[...], 0.0)                # (Nb*H*W, Cmid)

    # --- conv2 (3x3 grouped, stride, pad=1) as one im2col matmul -------------
    # Zero only the 1-pixel halo each step; the interior is fully overwritten.
    zrow = jnp.zeros((Nb, 1, W + 2, Cmid), jnp.float32)
    zcol = jnp.zeros((Nb, H, 1, Cmid), jnp.float32)
    pad_ref[:, pl.ds(0, 1), :, :] = zrow
    pad_ref[:, pl.ds(H + 1, 1), :, :] = zrow
    pad_ref[:, pl.ds(1, H), pl.ds(0, 1), :] = zcol
    pad_ref[:, pl.ds(1, H), pl.ds(W + 1, 1), :] = zcol
    pad_ref[:, pl.ds(1, H), pl.ds(1, W), :] = h1.reshape(Nb, H, W, Cmid)

    taps = []
    for kh in range(3):
        for kw in range(3):
            if stride == 1:
                tap = pad_ref[:, pl.ds(kh, Ho), pl.ds(kw, Wo), :]
            else:
                win = pad_ref[:, pl.ds(kh, stride * (Ho - 1) + 1),
                              pl.ds(kw, stride * (Wo - 1) + 1), :]
                tap = win[:, ::stride, ::stride, :]
            taps.append(tap.reshape(Nb * Ho * Wo, Cmid))
    cols = jnp.concatenate(taps, axis=-1)                  # (Nb*Ho*Wo, 9*Cmid)
    h2 = jnp.dot(cols, w2_ref[...], preferred_element_type=jnp.float32)
    h2 = jnp.maximum(h2 + b2_ref[...], 0.0)                # (Nb*Ho*Wo, Cmid)

    # --- conv3 (1x1) + shortcut ----------------------------------------------
    xs = x if stride == 1 else x[:, ::stride, ::stride, :]
    xs = xs.reshape(Nb * Ho * Wo, Cin)
    if has_proj:
        # Fuse projection shortcut into one matmul over [h2 | xs].
        cat = jnp.concatenate([h2, xs], axis=-1)           # (M, Cmid+Cin)
        out = jnp.dot(cat, w3sc_ref[...],
                      preferred_element_type=jnp.float32) + b3sc_ref[...]
    else:
        # Identity shortcut: plain residual add (no wasted identity matmul).
        out = (jnp.dot(h2, w3sc_ref[...],
                       preferred_element_type=jnp.float32)
               + b3sc_ref[...] + xs)
    out = jnp.maximum(out, 0.0)                            # (Nb*Ho*Wo, Cout)

    out_ref[...] = out.reshape(Nb, Ho, Wo, Cout).astype(out_ref.dtype)


def resnext_block(x_nhwc, params, *, stride, batch_block=None):
    N, H, W, Cin = x_nhwc.shape
    w1, b1, w2, b2, w3sc, b3sc = params
    Cmid = w1.shape[1]
    Cout = w3sc.shape[1]
    has_proj = (w3sc.shape[0] != Cmid)      # fused weight carries shortcut K
    Ho = (H + 2 - 3) // stride + 1
    Wo = (W + 2 - 3) // stride + 1

    # Pack several batch elements per grid step to fill the MXU M dimension
    # (~512 rows target) and amortize the ~0.35 us/step overhead.
    if batch_block is None:
        batch_block = 1
        for d in range(1, N + 1):
            if N % d == 0 and d * H * W <= 512:
                batch_block = d
    Nb = batch_block
    assert N % Nb == 0, "batch_block must divide N"

    kernel = functools.partial(_block_kernel, Nb=Nb, H=H, W=W, Cin=Cin,
                               Cmid=Cmid, Cout=Cout, stride=stride,
                               has_proj=has_proj)

    def rep(shape):
        nd = len(shape)
        return pl.BlockSpec(shape, lambda n, _nd=nd: (0,) * _nd)

    in_specs = [
        pl.BlockSpec((Nb, H, W, Cin), lambda n: (n, 0, 0, 0)),
        rep(w1.shape), rep(b1.shape),
        rep(w2.shape), rep(b2.shape),
        rep(w3sc.shape), rep(b3sc.shape),
    ]
    out_spec = pl.BlockSpec((Nb, Ho, Wo, Cout), lambda n: (n, 0, 0, 0))

    # TODO(synk): for real ResNeXt widths on v7x (64 MiB VMEM), add a spatial
    # row-band grid axis with a 1-row halo and set vmem_limit_bytes.
    return pl.pallas_call(
        kernel,
        out_shape=jax.ShapeDtypeStruct((N, Ho, Wo, Cout), x_nhwc.dtype),
        grid_spec=pltpu.PrefetchScalarGridSpec(
            num_scalar_prefetch=0,
            grid=(N // Nb,),
            in_specs=in_specs,
            out_specs=out_spec,
            scratch_shapes=[pltpu.VMEM((Nb, H + 2, W + 2, Cmid), jnp.float32)]),
        compiler_params=pltpu.CompilerParams(
            dimension_semantics=("parallel",)),
    )(x_nhwc, w1, b1, w2, b2, w3sc, b3sc)


def fold_bn(gamma, beta, mean, var, eps=1e-5):
    scale = gamma / jnp.sqrt(var + eps)
    bias = beta - mean * scale
    return scale, bias


def make_params(key, in_planes, cardinality, bottleneck_width, stride,
                expansion=2):
    gw = cardinality * bottleneck_width            # group_width (= Cmid)
    out_planes = expansion * gw                    # Cout
    ipg = gw // cardinality                        # channels per group
    has_proj = (stride != 1) or (in_planes != out_planes)

    ks = jax.random.split(key, 8)

    def bn(k, c):
        k1, k2, k3, k4 = jax.random.split(k, 4)
        gamma = 1.0 + 0.1 * jax.random.normal(k1, (c,), jnp.float32)
        beta = 0.1 * jax.random.normal(k2, (c,), jnp.float32)
        mean = 0.1 * jax.random.normal(k3, (c,), jnp.float32)
        var = jax.random.uniform(k4, (c,), jnp.float32, 0.5, 1.5)
        return fold_bn(gamma, beta, mean, var)

    # conv1: PyTorch (gw, in_planes, 1, 1) -> matmul weight (in_planes, gw)
    w1 = (0.1 * jax.random.normal(ks[0], (gw, in_planes), jnp.float32)).T
    s1, b1 = bn(ks[1], gw)

    # conv2: grouped 3x3, PyTorch weight (gw, ipg, 3, 3)
    w2_pt = 0.1 * jax.random.normal(ks[2], (gw, ipg, 3, 3), jnp.float32)
    s2, b2 = bn(ks[3], gw)
    # Dense block-diagonal per-tap weight (3,3,gw,gw).
    # TODO(synk): at real cardinality (32) this wastes cardinality x FLOPs /
    # VMEM; switch to per-group batched matmuls there.
    w2_dense = jnp.zeros((3, 3, gw, gw), jnp.float32)
    for g in range(cardinality):
        blk = jnp.transpose(w2_pt[g * ipg:(g + 1) * ipg], (2, 3, 1, 0))
        w2_dense = w2_dense.at[:, :, g * ipg:(g + 1) * ipg,
                               g * ipg:(g + 1) * ipg].set(blk)

    # conv3: (out_planes, gw, 1, 1) -> (gw, out_planes)
    w3 = (0.1 * jax.random.normal(ks[4], (out_planes, gw), jnp.float32)).T
    s3, b3 = bn(ks[5], out_planes)

    # ---- host-side folding: BN scales into weight columns -------------------
    w1_f = w1 * s1[None, :]
    w2_f = (w2_dense * s2[None, None, None, :]).reshape(9 * gw, gw)
    w3_f = w3 * s3[None, :]

    if has_proj:
        # shortcut: projection conv + BN, fused with conv3 into one
        # (gw + Cin, Cout) matmul with bias (b3 + bsc).
        wsc = (0.1 * jax.random.normal(ks[6], (out_planes, in_planes),
                                       jnp.float32)).T
        ssc, bsc = bn(ks[7], out_planes)
        wsc_f = wsc * ssc[None, :]
        w3sc = jnp.concatenate([w3_f, wsc_f], axis=0)
        b3sc = (b3 + bsc).reshape(1, out_planes)
    else:
        # identity shortcut: kernel adds xs directly (no identity matmul).
        wsc, ssc, bsc = None, None, None
        w3sc = w3_f
        b3sc = b3.reshape(1, out_planes)

    kernel_params = (w1_f, b1.reshape(1, gw), w2_f, b2.reshape(1, gw),
                     w3sc, b3sc)
    ref_params = dict(w1=w1, s1=s1, b1=b1, w2_pt=w2_pt, s2=s2, b2=b2,
                      w3=w3, s3=s3, b3=b3, wsc=wsc, ssc=ssc, bsc=bsc,
                      cardinality=cardinality, has_proj=has_proj)
    return kernel_params, ref_params


def ref_forward(x_nhwc, p, stride):
    h1 = jax.nn.relu(jnp.einsum('nhwc,cd->nhwd', x_nhwc, p['w1'])
                     * p['s1'] + p['b1'])
    w2_hwio = jnp.transpose(p['w2_pt'], (2, 3, 1, 0))      # (3,3,ipg,gw)
    h2 = lax.conv_general_dilated(
        h1, w2_hwio, (stride, stride), ((1, 1), (1, 1)),
        dimension_numbers=('NHWC', 'HWIO', 'NHWC'),
        feature_group_count=p['cardinality'])
    h2 = jax.nn.relu(h2 * p['s2'] + p['b2'])
    h3 = jnp.einsum('nhwc,cd->nhwd', h2, p['w3']) * p['s3'] + p['b3']
    xs = x_nhwc[:, ::stride, ::stride, :]
    if p['has_proj']:
        sc = jnp.einsum('nhwc,cd->nhwd', xs, p['wsc']) * p['ssc'] + p['bsc']
    else:
        sc = xs
    return jax.nn.relu(h3 + sc)


if __name__ == "__main__":
    key = jax.random.PRNGKey(0)
    N, H, W = 2, 8, 8

    configs = [
        # (in_planes, cardinality, bottleneck_width, stride)
        (16, 4, 8, 1),   # projection shortcut (in_planes != expansion*gw)
        (64, 4, 8, 1),   # identity shortcut  (in_planes == expansion*gw)
    ]

    for in_planes, cardinality, bottleneck_width, stride in configs:
        kx, kp, key = jax.random.split(key, 3)

        # PyTorch-style NCHW input, transposed to NHWC for the kernel.
        x_nchw = jax.random.normal(kx, (N, in_planes, H, W), jnp.float32)
        x_nhwc = jnp.transpose(x_nchw, (0, 2, 3, 1))

        kernel_params, ref_params = make_params(kp, in_planes, cardinality,
                                                bottleneck_width, stride)

        out = resnext_block(x_nhwc, kernel_params, stride=stride)
        out = jax.block_until_ready(out)

        ref = ref_forward(x_nhwc, ref_params, stride)
        np.testing.assert_allclose(np.asarray(out), np.asarray(ref),
                                   rtol=1e-4, atol=1e-4)

    print("KERNEL_OK")
</pallas_src>

<mosaic_0001>
module attributes {stable_mosaic.version = 11 : i64} {
  func.func @_block_kernel(%arg0: i32, %arg1: memref<2x8x8x16xf32, #tpu.memory_space<vmem>>, %arg2: memref<16x32xf32, #tpu.memory_space<vmem>>, %arg3: memref<1x32xf32, #tpu.memory_space<vmem>>, %arg4: memref<288x32xf32, #tpu.memory_space<vmem>>, %arg5: memref<1x32xf32, #tpu.memory_space<vmem>>, %arg6: memref<48x64xf32, #tpu.memory_space<vmem>>, %arg7: memref<1x64xf32, #tpu.memory_space<vmem>>, %arg8: memref<2x8x8x64xf32, #tpu.memory_space<vmem>>, %arg9: memref<2x10x10x32xf32, #tpu.memory_space<vmem>>) attributes {dimension_semantics = [#tpu.dimension_semantics<parallel>], iteration_bounds = array<i64: 1>, scalar_prefetch = 0 : i64, scratch_operands = 1 : i64, tpu.core_type = #tpu.core_type<tc>, window_params = [{transform_indices = @transform_0, window_bounds = array<i64: 2, 8, 8, 16>}, {pipeline_mode = #tpu.pipeline_mode<synchronous>, transform_indices = @transform_1, window_bounds = array<i64: 16, 32>}, {pipeline_mode = #tpu.pipeline_mode<synchronous>, transform_indices = @transform_2, window_bounds = array<i64: 1, 32>}, {pipeline_mode = #tpu.pipeline_mode<synchronous>, transform_indices = @transform_3, window_bounds = array<i64: 288, 32>}, {pipeline_mode = #tpu.pipeline_mode<synchronous>, transform_indices = @transform_4, window_bounds = array<i64: 1, 32>}, {pipeline_mode = #tpu.pipeline_mode<synchronous>, transform_indices = @transform_5, window_bounds = array<i64: 48, 64>}, {pipeline_mode = #tpu.pipeline_mode<synchronous>, transform_indices = @transform_6, window_bounds = array<i64: 1, 64>}, {transform_indices = @transform_7, window_bounds = array<i64: 2, 8, 8, 64>}]} {
    %c0 = arith.constant 0 : index
    %c0_0 = arith.constant 0 : index
    %c0_1 = arith.constant 0 : index
    %c0_2 = arith.constant 0 : index
    %0 = vector.load %arg1[%c0, %c0_0, %c0_1, %c0_2] : memref<2x8x8x16xf32, #tpu.memory_space<vmem>>, vector<2x8x8x16xf32>
    %1 = vector.shape_cast %0 : vector<2x8x8x16xf32> to vector<128x16xf32>
    %c0_3 = arith.constant 0 : index
    %c0_4 = arith.constant 0 : index
    %2 = vector.load %arg2[%c0_3, %c0_4] : memref<16x32xf32, #tpu.memory_space<vmem>>, vector<16x32xf32>
    %cst = arith.constant dense<0.000000e+00> : vector<128x32xf32>
    %3 = tpu.matmul %1, %2, %cst {dimension_numbers = #tpu.dot_dimension_numbers<[1], [0], [0], [1], [0, 0, 1, 1], [], []>} : vector<128x16xf32>, vector<16x32xf32>, vector<128x32xf32> -> vector<128x32xf32>
    %c0_5 = arith.constant 0 : index
    %c0_6 = arith.constant 0 : index
    %4 = vector.load %arg3[%c0_5, %c0_6] : memref<1x32xf32, #tpu.memory_space<vmem>>, vector<1x32xf32>
    %5 = vector.broadcast %4 : vector<1x32xf32> to vector<128x32xf32>
    %6 = arith.addf %3, %5 : vector<128x32xf32>
    %cst_7 = arith.constant 0.000000e+00 : f32
    %7 = vector.broadcast %cst_7 : f32 to vector<128x32xf32>
    %8 = arith.maximumf %6, %7 : vector<128x32xf32>
    %cst_8 = arith.constant 0.000000e+00 : f32
    %9 = vector.broadcast %cst_8 : f32 to vector<2x1x10x32xf32>
    %cst_9 = arith.constant 0.000000e+00 : f32
    %10 = vector.broadcast %cst_9 : f32 to vector<2x8x1x32xf32>
    %c0_10 = arith.constant 0 : index
    %c0_11 = arith.constant 0 : index
    %c0_12 = arith.constant 0 : index
    %c0_13 = arith.constant 0 : index
    %11 = vector.load %arg9[%c0_10, %c0_11, %c0_12, %c0_13] : memref<2x10x10x32xf32, #tpu.memory_space<vmem>>, vector<2x1x10x32xf32>
    tpu.vector_store %arg9[%c0_10, %c0_11, %c0_12, %c0_13], %9 {strides = array<i32>} : memref<2x10x10x32xf32, #tpu.memory_space<vmem>>, vector<2x1x10x32xf32>,
    %c0_14 = arith.constant 0 : index
    %c9 = arith.constant 9 : index
    %c0_15 = arith.constant 0 : index
    %c0_16 = arith.constant 0 : index
    %12 = vector.load %arg9[%c0_14, %c9, %c0_15, %c0_16] : memref<2x10x10x32xf32, #tpu.memory_space<vmem>>, vector<2x1x10x32xf32>
    tpu.vector_store %arg9[%c0_14, %c9, %c0_15, %c0_16], %9 {strides = array<i32>} : memref<2x10x10x32xf32, #tpu.memory_space<vmem>>, vector<2x1x10x32xf32>,
    %c0_17 = arith.constant 0 : index
    %c1 = arith.constant 1 : index
    %c0_18 = arith.constant 0 : index
    %c0_19 = arith.constant 0 : index
    %13 = vector.load %arg9[%c0_17, %c1, %c0_18, %c0_19] : memref<2x10x10x32xf32, #tpu.memory_space<vmem>>, vector<2x8x1x32xf32>
    tpu.vector_store %arg9[%c0_17, %c1, %c0_18, %c0_19], %10 {strides = array<i32>} : memref<2x10x10x32xf32, #tpu.memory_space<vmem>>, vector<2x8x1x32xf32>,
    %c0_20 = arith.constant 0 : index
    %c1_21 = arith.constant 1 : index
    %c9_22 = arith.constant 9 : index
    %c0_23 = arith.constant 0 : index
    %14 = vector.load %arg9[%c0_20, %c1_21, %c9_22, %c0_23] : memref<2x10x10x32xf32, #tpu.memory_space<vmem>>, vector<2x8x1x32xf32>
    tpu.vector_store %arg9[%c0_20, %c1_21, %c9_22, %c0_23], %10 {strides = array<i32>} : memref<2x10x10x32xf32, #tpu.memory_space<vmem>>, vector<2x8x1x32xf32>,
    %15 = vector.shape_cast %8 : vector<128x32xf32> to vector<2x8x8x32xf32>
    %c0_24 = arith.constant 0 : index
    %c1_25 = arith.constant 1 : index
    %c1_26 = arith.constant 1 : index
    %c0_27 = arith.constant 0 : index
    %16 = vector.load %arg9[%c0_24, %c1_25, %c1_26, %c0_27] : memref<2x10x10x32xf32, #tpu.memory_space<vmem>>, vector<2x8x8x32xf32>
    tpu.vector_store %arg9[%c0_24, %c1_25, %c1_26, %c0_27], %15 {strides = array<i32>} : memref<2x10x10x32xf32, #tpu.memory_space<vmem>>, vector<2x8x8x32xf32>,
    %c0_28 = arith.constant 0 : index
    %c0_29 = arith.constant 0 : index
    %c0_30 = arith.constant 0 : index
    %c0_31 = arith.constant 0 : index
    %17 = vector.load %arg9[%c0_28, %c0_29, %c0_30, %c0_31] : memref<2x10x10x32xf32, #tpu.memory_space<vmem>>, vector<2x8x8x32xf32>
    %18 = vector.shape_cast %17 : vector<2x8x8x32xf32> to vector<128x32xf32>
    %c0_32 = arith.constant 0 : index
    %c0_33 = arith.constant 0 : index
    %c1_34 = arith.constant 1 : index
    %c0_35 = arith.constant 0 : index
    %19 = vector.load %arg9[%c0_32, %c0_33, %c1_34, %c0_35] : memref<2x10x10x32xf32, #tpu.memory_space<vmem>>, vector<2x8x8x32xf32>
    %20 = vector.shape_cast %19 : vector<2x8x8x32xf32> to vector<128x32xf32>
    %c0_36 = arith.constant 0 : index
    %c0_37 = arith.constant 0 : index
    %c2 = arith.constant 2 : index
    %c0_38 = arith.constant 0 : index
    %21 = vector.load %arg9[%c0_36, %c0_37, %c2, %c0_38] : memref<2x10x10x32xf32, #tpu.memory_space<vmem>>, vector<2x8x8x32xf32>
    %22 = vector.shape_cast %21 : vector<2x8x8x32xf32> to vector<128x32xf32>
    %c0_39 = arith.constant 0 : index
    %c1_40 = arith.constant 1 : index
    %c0_41 = arith.constant 0 : index
    %c0_42 = arith.constant 0 : index
    %23 = vector.load %arg9[%c0_39, %c1_40, %c0_41, %c0_42] : memref<2x10x10x32xf32, #tpu.memory_space<vmem>>, vector<2x8x8x32xf32>
    %24 = vector.shape_cast %23 : vector<2x8x8x32xf32> to vector<128x32xf32>
    %c0_43 = arith.constant 0 : index
    %c1_44 = arith.constant 1 : index
    %c1_45 = arith.constant 1 : index
    %c0_46 = arith.constant 0 : index
    %25 = vector.load %arg9[%c0_43, %c1_44, %c1_45, %c0_46] : memref<2x10x10x32xf32, #tpu.memory_space<vmem>>, vector<2x8x8x32xf32>
    %26 = vector.shape_cast %25 : vector<2x8x8x32xf32> to vector<128x32xf32>
    %c0_47 = arith.constant 0 : index
    %c1_48 = arith.constant 1 : index
    %c2_49 = arith.constant 2 : index
    %c0_50 = arith.constant 0 : index
    %27 = vector.load %arg9[%c0_47, %c1_48, %c2_49, %c0_50] : memref<2x10x10x32xf32, #tpu.memory_space<vmem>>, vector<2x8x8x32xf32>
    %28 = vector.shape_cast %27 : vector<2x8x8x32xf32> to vector<128x32xf32>
    %c0_51 = arith.constant 0 : index
    %c2_52 = arith.constant 2 : index
    %c0_53 = arith.constant 0 : index
    %c0_54 = arith.constant 0 : index
    %29 = vector.load %arg9[%c0_51, %c2_52, %c0_53, %c0_54] : memref<2x10x10x32xf32, #tpu.memory_space<vmem>>, vector<2x8x8x32xf32>
    %30 = vector.shape_cast %29 : vector<2x8x8x32xf32> to vector<128x32xf32>
    %c0_55 = arith.constant 0 : index
    %c2_56 = arith.constant 2 : index
    %c1_57 = arith.constant 1 : index
    %c0_58 = arith.constant 0 : index
    %31 = vector.load %arg9[%c0_55, %c2_56, %c1_57, %c0_58] : memref<2x10x10x32xf32, #tpu.memory_space<vmem>>, vector<2x8x8x32xf32>
    %32 = vector.shape_cast %31 : vector<2x8x8x32xf32> to vector<128x32xf32>
    %c0_59 = arith.constant 0 : index
    %c2_60 = arith.constant 2 : index
    %c2_61 = arith.constant 2 : index
    %c0_62 = arith.constant 0 : index
    %33 = vector.load %arg9[%c0_59, %c2_60, %c2_61, %c0_62] : memref<2x10x10x32xf32, #tpu.memory_space<vmem>>, vector<2x8x8x32xf32>
    %34 = vector.shape_cast %33 : vector<2x8x8x32xf32> to vector<128x32xf32>
    %35 = tpu.concatenate %18, %20, %22, %24, %26, %28, %30, %32, %34 in 1 : vector<128x32xf32>, vector<128x32xf32>, vector<128x32xf32>, vector<128x32xf32>, vector<128x32xf32>, vector<128x32xf32>, vector<128x32xf32>, vector<128x32xf32>, vector<128x32xf32> -> vector<128x288xf32>
    %c0_63 = arith.constant 0 : index
    %c0_64 = arith.constant 0 : index
    %36 = vector.load %arg4[%c0_63, %c0_64] : memref<288x32xf32, #tpu.memory_space<vmem>>, vector<288x32xf32>
    %cst_65 = arith.constant dense<0.000000e+00> : vector<128x32xf32>
    %37 = tpu.matmul %35, %36, %cst_65 {dimension_numbers = #tpu.dot_dimension_numbers<[1], [0], [0], [1], [0, 0, 1, 1], [], []>} : vector<128x288xf32>, vector<288x32xf32>, vector<128x32xf32> -> vector<128x32xf32>
    %c0_66 = arith.constant 0 : index
    %c0_67 = arith.constant 0 : index
    %38 = vector.load %arg5[%c0_66, %c0_67] : memref<1x32xf32, #tpu.memory_space<vmem>>, vector<1x32xf32>
    %39 = vector.broadcast %38 : vector<1x32xf32> to vector<128x32xf32>
    %40 = arith.addf %37, %39 : vector<128x32xf32>
    %cst_68 = arith.constant 0.000000e+00 : f32
    %41 = vector.broadcast %cst_68 : f32 to vector<128x32xf32>
    %42 = arith.maximumf %40, %41 : vector<128x32xf32>
    %43 = vector.shape_cast %0 : vector<2x8x8x16xf32> to vector<128x16xf32>
    %44 = tpu.concatenate %42, %43 in 1 : vector<128x32xf32>, vector<128x16xf32> -> vector<128x48xf32>
    %c0_69 = arith.constant 0 : index
    %c0_70 = arith.constant 0 : index
    %45 = vector.load %arg6[%c0_69, %c0_70] : memref<48x64xf32, #tpu.memory_space<vmem>>, vector<48x64xf32>
    %cst_71 = arith.constant dense<0.000000e+00> : vector<128x64xf32>
    %46 = tpu.matmul %44, %45, %cst_71 {dimension_numbers = #tpu.dot_dimension_numbers<[1], [0], [0], [1], [0, 0, 1, 1], [], []>} : vector<128x48xf32>, vector<48x64xf32>, vector<128x64xf32> -> vector<128x64xf32>
    %c0_72 = arith.constant 0 : index
    %c0_73 = arith.constant 0 : index
    %47 = vector.load %arg7[%c0_72, %c0_73] : memref<1x64xf32, #tpu.memory_space<vmem>>, vector<1x64xf32>
    %48 = vector.broadcast %47 : vector<1x64xf32> to vector<128x64xf32>
    %49 = arith.addf %46, %48 : vector<128x64xf32>
    %cst_74 = arith.constant 0.000000e+00 : f32
    %50 = vector.broadcast %cst_74 : f32 to vector<128x64xf32>
    %51 = arith.maximumf %49, %50 : vector<128x64xf32>
    %52 = vector.shape_cast %51 : vector<128x64xf32> to vector<2x8x8x64xf32>
    %c0_75 = arith.constant 0 : index
    %c0_76 = arith.constant 0 : index
    %c0_77 = arith.constant 0 : index
    %c0_78 = arith.constant 0 : index
    %53 = vector.load %arg8[%c0_75, %c0_76, %c0_77, %c0_78] : memref<2x8x8x64xf32, #tpu.memory_space<vmem>>, vector<2x8x8x64xf32>
    tpu.vector_store %arg8[%c0_75, %c0_76, %c0_77, %c0_78], %52 {strides = array<i32>} : memref<2x8x8x64xf32, #tpu.memory_space<vmem>>, vector<2x8x8x64xf32>,
    return
  }
  func.func @transform_0(%arg0: i32) -> (i32, i32, i32, i32) {
    %c0_i32 = arith.constant 0 : i32
    %c0_i32_0 = arith.constant 0 : i32
    %c0_i32_1 = arith.constant 0 : i32
    %c0_i32_2 = arith.constant 0 : i32
    return %arg0, %c0_i32, %c0_i32_0, %c0_i32_1 : i32, i32, i32, i32
  }
  func.func @transform_1(%arg0: i32) -> (i32, i32) {
    %c0_i32 = arith.constant 0 : i32
    %c0_i32_0 = arith.constant 0 : i32
    %c0_i32_1 = arith.constant 0 : i32
    return %c0_i32, %c0_i32_0 : i32, i32
  }
  func.func @transform_2(%arg0: i32) -> (i32, i32) {
    %c0_i32 = arith.constant 0 : i32
    %c0_i32_0 = arith.constant 0 : i32
    %c0_i32_1 = arith.constant 0 : i32
    return %c0_i32, %c0_i32_0 : i32, i32
  }
  func.func @transform_3(%arg0: i32) -> (i32, i32) {
    %c0_i32 = arith.constant 0 : i32
    %c0_i32_0 = arith.constant 0 : i32
    %c0_i32_1 = arith.constant 0 : i32
    return %c0_i32, %c0_i32_0 : i32, i32
  }
  func.func @transform_4(%arg0: i32) -> (i32, i32) {
    %c0_i32 = arith.constant 0 : i32
    %c0_i32_0 = arith.constant 0 : i32
    %c0_i32_1 = arith.constant 0 : i32
    return %c0_i32, %c0_i32_0 : i32, i32
  }
  func.func @transform_5(%arg0: i32) -> (i32, i32) {
    %c0_i32 = arith.constant 0 : i32
    %c0_i32_0 = arith.constant 0 : i32
    %c0_i32_1 = arith.constant 0 : i32
    return %c0_i32, %c0_i32_0 : i32, i32
  }
  func.func @transform_6(%arg0: i32) -> (i32, i32) {
    %c0_i32 = arith.constant 0 : i32
    %c0_i32_0 = arith.constant 0 : i32
    %c0_i32_1 = arith.constant 0 : i32
    return %c0_i32, %c0_i32_0 : i32, i32
  }
  func.func @transform_7(%arg0: i32) -> (i32, i32, i32, i32) {
    %c0_i32 = arith.constant 0 : i32
    %c0_i32_0 = arith.constant 0 : i32
    %c0_i32_1 = arith.constant 0 : i32
    %c0_i32_2 = arith.constant 0 : i32
    return %arg0, %c0_i32, %c0_i32_0, %c0_i32_1 : i32, i32, i32, i32
  }
}

</mosaic_0001>

<llo_original>
// kernel: tpu_custom_call.1
$region0: #{tpu_custom_call.1}
  #allocation0 [shape = 'u32[]', space=smem, size = 0x4, offset = 0x4, fixed_abs, tag = 'smem constant byte address 0x4 - core index']
  #allocation1 [shape = 'u32[144,128]{1,0:T(1,128)}', space=vmem, size = 0x12000, scoped, tag = 'internal scratch']
  #allocation2 [shape = 'f32[2,10,10,32]{3,2,1,0:T(8,128)}', space=vmem, size = 0x28000, scoped, tag = 'scratch operand']
  %s0 = inlined_call_operand.vmem [shape: f32[2,8,8,16], index: 0, kind: input, shape index: {}]
  %s1 = inlined_call_operand.vmem [shape: f32[16,32], index: 1, kind: input, shape index: {}]
  %s2 = inlined_call_operand.vmem [shape: f32[1,32], index: 2, kind: input, shape index: {}]
  %s3 = inlined_call_operand.vmem [shape: f32[288,32], index: 3, kind: input, shape index: {}]
  %s4 = inlined_call_operand.vmem [shape: f32[1,32], index: 4, kind: input, shape index: {}]
  %s5 = inlined_call_operand.vmem [shape: f32[48,64], index: 5, kind: input, shape index: {}]
  %s6 = inlined_call_operand.vmem [shape: f32[1,64], index: 6, kind: input, shape index: {}]
  %s7 = inlined_call_operand.hbm [shape: f32[2,8,8,64], index: 7, kind: output, shape index: {}]
  %s8 = sld [smem:[#allocation0]]
  $region38: #{tpu_custom_call.1} parent=0
    _
  %s10 = ssub.s32 1, %s8
  %s11 = scalar_select 0, %s10, %s8
  $region1: #{tpu_custom_call.1} parent=0
    #allocation3 [shape = 'u8[65536]{0}', space=vmem, size = 0x10000, scoped, tag = 'output window, operand 0, single buffered']
    #allocation4 [shape = 's32[1]{0}', space=sflag, size = 0x4, scoped, tag = 'scoped memory for tpu_custom_call.1']
    %12 = vsyncpa [#allocation4], 0
    // Predicated region
    $region2: #{tpu_custom_call.1} parent=1 // pred_check
      _
    $region3: #{tpu_custom_call.1} parent=1 // pred_check_branch
      %14 = sbr.rel (0) target = $region5
    $region4: #{tpu_custom_call.1} parent=1 // pred_region
      _
    $region5: #{tpu_custom_call.1} parent=1 // pred_fallthru
      _
    // Predicated region
    $region6: #{tpu_custom_call.1} parent=1 // pred_check
      _
    $region7: #{tpu_custom_call.1} parent=1 // pred_check_branch
      %16 = sbr.rel (0) target = $region9
    $region8: #{tpu_custom_call.1} parent=1 // pred_region
      _
    $region9: #{tpu_custom_call.1} parent=1 // pred_fallthru
      _
    // Predicated region
    $region10: #{tpu_custom_call.1} parent=1 // pred_check
      _
    $region11: #{tpu_custom_call.1} parent=1 // pred_check_branch
      %18 = sbr.rel (0) target = $region13
    $region12: #{tpu_custom_call.1} parent=1 // pred_region
      _
    $region13: #{tpu_custom_call.1} parent=1 // pred_fallthru
      _
    // Predicated region
    $region14: #{tpu_custom_call.1} parent=1 // pred_check
      _
    $region15: #{tpu_custom_call.1} parent=1 // pred_check_branch
      %20 = sbr.rel (0) target = $region17
    $region16: #{tpu_custom_call.1} parent=1 // pred_region
      _
    $region17: #{tpu_custom_call.1} parent=1 // pred_fallthru
      _
    // Predicated region
    $region18: #{tpu_custom_call.1} parent=1 // pred_check
      _
    $region19: #{tpu_custom_call.1} parent=1 // pred_check_branch
      %22 = sbr.rel (0) target = $region21
    $region20: #{tpu_custom_call.1} parent=1 // pred_region
      _
    $region21: #{tpu_custom_call.1} parent=1 // pred_fallthru
      _
    // Predicated region
    $region22: #{tpu_custom_call.1} parent=1 // pred_check
      _
    $region23: #{tpu_custom_call.1} parent=1 // pred_check_branch
      %24 = sbr.rel (0) target = $region25
    $region24: #{tpu_custom_call.1} parent=1 // pred_region
      _
    $region25: #{tpu_custom_call.1} parent=1 // pred_fallthru
      _
    // Predicated region
    $region26: #{tpu_custom_call.1} parent=1 // pred_check
      _
    $region27: #{tpu_custom_call.1} parent=1 // pred_check_branch
      %26 = sbr.rel (0) target = $region29
    $region28: #{tpu_custom_call.1} parent=1 // pred_region
      _
    $region29: #{tpu_custom_call.1} parent=1 // pred_fallthru
      _
    %v27 = vld [vmem:[%s0] sm:$0xff]
    %v28 = vld [vmem:[%s0 + $0x8] sm:$0xff]
    %v29 = vld [vmem:[%s0 + $0x10] sm:$0xff]
    %v30 = vld [vmem:[%s0 + $0x18] sm:$0xff]
    %v31 = vld [vmem:[%s0 + $0x20] sm:$0xff]
    %v32 = vld [vmem:[%s0 + $0x28] sm:$0xff]
    %v33 = vld [vmem:[%s0 + $0x30] sm:$0xff]
    %v34 = vld [vmem:[%s0 + $0x38] sm:$0xff]
    %v35 = vld [vmem:[%s0 + $0x40] sm:$0xff]
    %v36 = vld [vmem:[%s0 + $0x48] sm:$0xff]
    %v37 = vld [vmem:[%s0 + $0x50] sm:$0xff]
    %v38 = vld [vmem:[%s0 + $0x58] sm:$0xff]
    %v39 = vld [vmem:[%s0 + $0x60] sm:$0xff]
    %v40 = vld [vmem:[%s0 + $0x68] sm:$0xff]
    %v41 = vld [vmem:[%s0 + $0x70] sm:$0xff]
    %v42 = vld [vmem:[%s0 + $0x78] sm:$0xff]
    %v43 = vld [vmem:[%s1] sm:$0xff]
    %v44 = vld [vmem:[%s1 + $0x8] sm:$0xff]
    %v45 = vld [vmem:[%s2] sm:$0x1]
    %v47 = vlaneseq
    %v48 = vshrl.u32 %v47, 7
    %v49 = vsub.s32 0, %v48
    %v50 = vrot.slane %v45, %v49
    %vm52 = vcmask 130048
    %v54 = vsel %vm52, %v27, 0
    %v57 = vsel %vm52, %v28, 0
    %v60 = vsel %vm52, %v29, 0
    %v63 = vsel %vm52, %v30, 0
    %v66 = vsel %vm52, %v31, 0
    %v69 = vsel %vm52, %v32, 0
    %v72 = vsel %vm52, %v33, 0
    %v75 = vsel %vm52, %v34, 0
    %v78 = vsel %vm52, %v35, 0
    %v81 = vsel %vm52, %v36, 0
    %v84 = vsel %vm52, %v37, 0
    %v87 = vsel %vm52, %v38, 0
    %v90 = vsel %vm52, %v39, 0
    %v93 = vsel %vm52, %v40, 0
    %v96 = vsel %vm52, %v41, 0
    %v99 = vsel %vm52, %v42, 0
    %101 = vmatprep.subr.mxu0 0.0
    %102 = vmatpush1.msra.mxu0 0.0
    %103 = vmatprep.subr.mxu0 0.0
    %104 = vmatpush1.msra.mxu0 0.0
    %105 = vmatprep.subr.mxu0 0.0
    %106 = vmatpush1.msra.mxu0 0.0
    %107 = vmatprep.subr.mxu0 0.0
    %108 = vmatpush1.msra.mxu0 0.0
    %109 = vmatprep.subr.mxu0 0.0
    %110 = vmatpush1.msra.mxu0 0.0
    %111 = vmatprep.subr.mxu0 0.0
    %112 = vmatpush1.msra.mxu0 0.0
    %113 = vmatprep.subr.mxu0 0.0
    %114 = vmatpush1.msra.mxu0 0.0
    %115 = vmatprep.subr.mxu0 0.0
    %116 = vmatpush1.msra.mxu0 0.0
    %117 = vmatprep.subr.mxu0 0.0
    %118 = vmatpush1.msra.mxu0 0.0
    %119 = vmatprep.subr.mxu0 0.0
    %120 = vmatpush1.msra.mxu0 0.0
    %121 = vmatprep.subr.mxu0 0.0
    %122 = vmatpush1.msra.mxu0 0.0
    %123 = vmatprep.subr.mxu0 0.0
    %124 = vmatpush1.msra.mxu0 0.0
    %125 = vmatprep.subr.mxu0 0.0
    %126 = vmatpush1.msra.mxu0 0.0
    %127 = vmatprep.subr.mxu0 0.0
    %128 = vmatpush1.msra.mxu0 0.0
    %129 = vmatprep.subr.mxu0 0.0
    %130 = vmatpush1.msra.mxu0 %v44
    %131 = vmatprep.subr.mxu0 0.0
    %132 = vmatpush1.msra.mxu0 %v43
    %133 = vmatprep.subr.mxu0 0.0
    %134 = vmatpush2.msra.mxu0 0.0
    %135 = vmatprep.subr.mxu0 0.0
    %136 = vmatpush2.msra.mxu0 0.0
    %137 = vmatprep.subr.mxu0 0.0
    %138 = vmatpush2.msra.mxu0 0.0
    %139 = vmatprep.subr.mxu0 0.0
    %140 = vmatpush2.msra.mxu0 0.0
    %141 = vmatprep.subr.mxu0 0.0
    %142 = vmatpush2.msra.mxu0 0.0
    %143 = vmatprep.subr.mxu0 0.0
    %144 = vmatpush2.msra.mxu0 0.0
    %145 = vmatprep.subr.mxu0 0.0
    %146 = vmatpush2.msra.mxu0 0.0
    %147 = vmatprep.subr.mxu0 0.0
    %148 = vmatpush2.msra.mxu0 0.0
    %149 = vmatprep.subr.mxu0 0.0
    %150 = vmatpush2.msra.mxu0 0.0
    %151 = vmatprep.subr.mxu0 0.0
    %152 = vmatpush2.msra.mxu0 0.0
    %153 = vmatprep.subr.mxu0 0.0
    %154 = vmatpush2.msra.mxu0 0.0
    %155 = vmatprep.subr.mxu0 0.0
    %156 = vmatpush2.msra.mxu0 0.0
    %157 = vmatprep.subr.mxu0 0.0
    %158 = vmatpush2.msra.mxu0 0.0
    %159 = vmatprep.subr.mxu0 0.0
    %160 = vmatpush2.msra.mxu0 0.0
    %161 = vmatprep.subr.mxu0 0.0
    %162 = vmatpush2.msra.mxu0 0.0
    %163 = vmatprep.subr.mxu0 0.0
    %164 = vmatpush2.msra.mxu0 0.0
    %165 = vmatprep.mubr.f32.mxu0 0.0
    %166 = vmatmul.mubr.f32.gmra.mxu0 %v54
    %v167 = vpop.f32.mrf.mxu0
    %v168 = vadd.f32 %v50, %v167
    %v169 = vpop.f32.mrf.mxu0
    %170 = vmatprep.mubr.f32.mxu0 0.0
    %171 = vmatmul.mubr.f32.gmra.mxu0 %v57
    %v172 = vpop.f32.mrf.mxu0
    %v173 = vadd.f32 %v50, %v172
    %v174 = vpop.f32.mrf.mxu0
    %175 = vmatprep.mubr.f32.mxu0 0.0
    %176 = vmatmul.mubr.f32.gmra.mxu0 %v60
    %v177 = vpop.f32.mrf.mxu0
    %v178 = vadd.f32 %v50, %v177
    %v179 = vpop.f32.mrf.mxu0
    %180 = vmatprep.mubr.f32.mxu0 0.0
    %181 = vmatmul.mubr.f32.gmra.mxu0 %v63
    %v182 = vpop.f32.mrf.mxu0
    %v183 = vadd.f32 %v50, %v182
    %v184 = vpop.f32.mrf.mxu0
    %185 = vmatprep.mubr.f32.mxu0 0.0
    %186 = vmatmul.mubr.f32.gmra.mxu0 %v66
    %v187 = vpop.f32.mrf.mxu0
    %v188 = vadd.f32 %v50, %v187
    %v189 = vpop.f32.mrf.mxu0
    %190 = vmatprep.mubr.f32.mxu0 0.0
    %191 = vmatmul.mubr.f32.gmra.mxu0 %v69
    %v192 = vpop.f32.mrf.mxu0
    %v193 = vadd.f32 %v50, %v192
    %v194 = vpop.f32.mrf.mxu0
    %195 = vmatprep.mubr.f32.mxu0 0.0
    %196 = vmatmul.mubr.f32.gmra.mxu0 %v72
    %v197 = vpop.f32.mrf.mxu0
    %v198 = vadd.f32 %v50, %v197
    %v199 = vpop.f32.mrf.mxu0
    %200 = vmatprep.mubr.f32.mxu0 0.0
    %201 = vmatmul.mubr.f32.gmra.mxu0 %v75
    %v202 = vpop.f32.mrf.mxu0
    %v203 = vadd.f32 %v50, %v202
    %v204 = vpop.f32.mrf.mxu0
    %205 = vmatprep.mubr.f32.mxu0 0.0
    %206 = vmatmul.mubr.f32.gmra.mxu0 %v78
    %v207 = vpop.f32.mrf.mxu0
    %v208 = vadd.f32 %v50, %v207
    %v209 = vpop.f32.mrf.mxu0
    %210 = vmatprep.mubr.f32.mxu0 0.0
    %211 = vmatmul.mubr.f32.gmra.mxu0 %v81
    %v212 = vpop.f32.mrf.mxu0
    %v213 = vadd.f32 %v50, %v212
    %v214 = vpop.f32.mrf.mxu0
    %215 = vmatprep.mubr.f32.mxu0 0.0
    %216 = vmatmul.mubr.f32.gmra.mxu0 %v84
    %v217 = vpop.f32.mrf.mxu0
    %v218 = vadd.f32 %v50, %v217
    %v219 = vpop.f32.mrf.mxu0
    %220 = vmatprep.mubr.f32.mxu0 0.0
    %221 = vmatmul.mubr.f32.gmra.mxu0 %v87
    %v222 = vpop.f32.mrf.mxu0
    %v223 = vadd.f32 %v50, %v222
    %v224 = vpop.f32.mrf.mxu0
    %225 = vmatprep.mubr.f32.mxu0 0.0
    %226 = vmatmul.mubr.f32.gmra.mxu0 %v90
    %v227 = vpop.f32.mrf.mxu0
    %v228 = vadd.f32 %v50, %v227
    %v229 = vpop.f32.mrf.mxu0
    %230 = vmatprep.mubr.f32.mxu0 0.0
    %231 = vmatmul.mubr.f32.gmra.mxu0 %v93
    %v232 = vpop.f32.mrf.mxu0
    %v233 = vadd.f32 %v50, %v232
    %v234 = vpop.f32.mrf.mxu0
    %235 = vmatprep.mubr.f32.mxu0 0.0
    %236 = vmatmul.mubr.f32.gmra.mxu0 %v96
    %v237 = vpop.f32.mrf.mxu0
    %v238 = vadd.f32 %v50, %v237
    %v239 = vpop.f32.mrf.mxu0
    %240 = vmatprep.mubr.f32.mxu0 0.0
    %241 = vmatmul.mubr.f32.gmra.mxu0 %v99
    %v242 = vpop.f32.mrf.mxu0
    %v243 = vadd.f32 %v50, %v242
    %v244 = vpop.f32.mrf.mxu0
    %245 = vdwg.mxu0
    %v246 = vmax.f32 %v168, 0.0
    %v247 = vmax.f32 %v173, 0.0
    %v248 = vmax.f32 %v178, 0.0
    %v249 = vmax.f32 %v183, 0.0
    %v250 = vmax.f32 %v188, 0.0
    %v251 = vmax.f32 %v193, 0.0
    %v252 = vmax.f32 %v198, 0.0
    %v253 = vmax.f32 %v203, 0.0
    %v254 = vmax.f32 %v208, 0.0
    %v255 = vmax.f32 %v213, 0.0
    %v256 = vmax.f32 %v218, 0.0
    %v257 = vmax.f32 %v223, 0.0
    %v258 = vmax.f32 %v228, 0.0
    %v259 = vmax.f32 %v233, 0.0
    %v260 = vmax.f32 %v238, 0.0
    %v261 = vmax.f32 %v243, 0.0
    %vm262 = vcmask 261120
    %263 = vst.msk [vmem:[#allocation2] sm:$0xff] %vm262, 0.0
    %vm264 = vcmask 254976
    %265 = vst.msk [vmem:[#allocation2 + $0x8] sm:$0x3] %vm264, 0.0
    %266 = vst.msk [vmem:[#allocation2 + $0xa0] sm:$0xff] %vm262, 0.0
    %267 = vst.msk [vmem:[#allocation2 + $0xa8] sm:$0x3] %vm264, 0.0
    %s268 = scalar_lea.vmem [#allocation2], 144
    %269 = vst.msk [vmem:[%s268] sm:$0xff] %vm262, 0.0
    %270 = vst.msk [vmem:[%s268 + $0x8] sm:$0x3] %vm264, 0.0
    %271 = vst.msk [vmem:[%s268 + $0xa0] sm:$0xff] %vm262, 0.0
    %272 = vst.msk [vmem:[%s268 + $0xa8] sm:$0x3] %vm264, 0.0
    %s273 = scalar_lea.vmem [#allocation2], 16
    %vm274 = vcmask 253952
    %275 = vst.msk [vmem:[%s273] sm:$0x1] %vm274, 0.0
    %276 = vst.msk [vmem:[%s273 + $0x10] sm:$0x1] %vm274, 0.0
    %277 = vst.msk [vmem:[%s273 + $0x20] sm:$0x1] %vm274, 0.0
    %278 = vst.msk [vmem:[%s273 + $0x30] sm:$0x1] %vm274, 0.0
    %279 = vst.msk [vmem:[%s273 + $0x40] sm:$0x1] %vm274, 0.0
    %280 = vst.msk [vmem:[%s273 + $0x50] sm:$0x1] %vm274, 0.0
    %281 = vst.msk [vmem:[%s273 + $0x60] sm:$0x1] %vm274, 0.0
    %282 = vst.msk [vmem:[%s273 + $0x70] sm:$0x1] %vm274, 0.0
    %283 = vst.msk [vmem:[%s273 + $0xa0] sm:$0x1] %vm274, 0.0
    %284 = vst.msk [vmem:[%s273 + $0xb0] sm:$0x1] %vm274, 0.0
    %285 = vst.msk [vmem:[%s273 + $0xc0] sm:$0x1] %vm274, 0.0
    %286 = vst.msk [vmem:[%s273 + $0xd0] sm:$0x1] %vm274, 0.0
    %287 = vst.msk [vmem:[%s273 + $0xe0] sm:$0x1] %vm274, 0.0
    %288 = vst.msk [vmem:[%s273 + $0xf0] sm:$0x1] %vm274, 0.0
    %289 = vst.msk [vmem:[%s273 + $0x100] sm:$0x1] %vm274, 0.0
    %290 = vst.msk [vmem:[%s273 + $0x110] sm:$0x1] %vm274, 0.0
    %291 = vst.msk [vmem:[%s273 + $0x9] sm:$0x1] %vm274, 0.0
    %292 = vst.msk [vmem:[%s273 + $0x19] sm:$0x1] %vm274, 0.0
    %293 = vst.msk [vmem:[%s273 + $0x29] sm:$0x1] %vm274, 0.0
    %294 = vst.msk [vmem:[%s273 + $0x39] sm:$0x1] %vm274, 0.0
    %295 = vst.msk [vmem:[%s273 + $0x49] sm:$0x1] %vm274, 0.0
    %296 = vst.msk [vmem:[%s273 + $0x59] sm:$0x1] %vm274, 0.0
    %297 = vst.msk [vmem:[%s273 + $0x69] sm:$0x1] %vm274, 0.0
    %298 = vst.msk [vmem:[%s273 + $0x79] sm:$0x1] %vm274, 0.0
    %299 = vst.msk [vmem:[%s273 + $0xa9] sm:$0x1] %vm274, 0.0
    %300 = vst.msk [vmem:[%s273 + $0xb9] sm:$0x1] %vm274, 0.0
    %301 = vst.msk [vmem:[%s273 + $0xc9] sm:$0x1] %vm274, 0.0
    %302 = vst.msk [vmem:[%s273 + $0xd9] sm:$0x1] %vm274, 0.0
    %303 = vst.msk [vmem:[%s273 + $0xe9] sm:$0x1] %vm274, 0.0
    %304 = vst.msk [vmem:[%s273 + $0xf9] sm:$0x1] %vm274, 0.0
    %305 = vst.msk [vmem:[%s273 + $0x109] sm:$0x1] %vm274, 0.0
    %306 = vst.msk [vmem:[%s273 + $0x119] sm:$0x1] %vm274, 0.0
    %307 = vst.msk [vmem:[%s273 + $0x1] sm:$0xff] %vm262, %v246
    %308 = vst.msk [vmem:[%s273 + $0x11] sm:$0xff] %vm262, %v247
    %309 = vst.msk [vmem:[%s273 + $0x21] sm:$0xff] %vm262, %v248
    %310 = vst.msk [vmem:[%s273 + $0x31] sm:$0xff] %vm262, %v249
    %311 = vst.msk [vmem:[%s273 + $0x41] sm:$0xff] %vm262, %v250
    %312 = vst.msk [vmem:[%s273 + $0x51] sm:$0xff] %vm262, %v251
    %313 = vst.msk [vmem:[%s273 + $0x61] sm:$0xff] %vm262, %v252
    %314 = vst.msk [vmem:[%s273 + $0x71] sm:$0xff] %vm262, %v253
    %315 = vst.msk [vmem:[%s273 + $0xa1] sm:$0xff] %vm262, %v254
    %316 = vst.msk [vmem:[%s273 + $0xb1] sm:$0xff] %vm262, %v255
    %317 = vst.msk [vmem:[%s273 + $0xc1] sm:$0xff] %vm262, %v256
    %318 = vst.msk [vmem:[%s273 + $0xd1] sm:$0xff] %vm262, %v257
    %319 = vst.msk [vmem:[%s273 + $0xe1] sm:$0xff] %vm262, %v258
    %320 = vst.msk [vmem:[%s273 + $0xf1] sm:$0xff] %vm262, %v259
    %321 = vst.msk [vmem:[%s273 + $0x101] sm:$0xff] %vm262, %v260
    %322 = vst.msk [vmem:[%s273 + $0x111] sm:$0xff] %vm262, %v261
    %v323 = vld [vmem:[#allocation2] sm:$0xff]
    %v324 = vld [vmem:[#allocation2 + $0x10] sm:$0xff]
    %v325 = vld [vmem:[#allocation2 + $0x20] sm:$0xff]
    %v326 = vld [vmem:[#allocation2 + $0x30] sm:$0xff]
    %v327 = vld [vmem:[#allocation2 + $0x40] sm:$0xff]
    %v328 = vld [vmem:[#allocation2 + $0x50] sm:$0xff]
    %v329 = vld [vmem:[#allocation2 + $0x60] sm:$0xff]
    %v330 = vld [vmem:[#allocation2 + $0x70] sm:$0xff]
    %v331 = vld [vmem:[#allocation2 + $0xa0] sm:$0xff]
    %v332 = vld [vmem:[#allocation2 + $0xb0] sm:$0xff]
    %v333 = vld [vmem:[#allocation2 + $0xc0] sm:$0xff]
    %v334 = vld [vmem:[#allocation2 + $0xd0] sm:$0xff]
    %v335 = vld [vmem:[#allocation2 + $0xe0] sm:$0xff]
    %v336 = vld [vmem:[#allocation2 + $0xf0] sm:$0xff]
    %v337 = vld [vmem:[#allocation2 + $0x100] sm:$0xff]
    %v338 = vld [vmem:[#allocation2 + $0x110] sm:$0xff]
    %v339 = vld [vmem:[#allocation2 + $0x1] sm:$0xff]
    %v340 = vld [vmem:[#allocation2 + $0x11] sm:$0xff]
    %v341 = vld [vmem:[#allocation2 + $0x21] sm:$0xff]
    %v342 = vld [vmem:[#allocation2 + $0x31] sm:$0xff]
    %v343 = vld [vmem:[#allocation2 + $0x41] sm:$0xff]
    %v344 = vld [vmem:[#allocation2 + $0x51] sm:$0xff]
    %v345 = vld [vmem:[#allocation2 + $0x61] sm:$0xff]
    %v346 = vld [vmem:[#allocation2 + $0x71] sm:$0xff]
    %v347 = vld [vmem:[#allocation2 + $0xa1] sm:$0xff]
    %v348 = vld [vmem:[#allocation2 + $0xb1] sm:$0xff]
    %v349 = vld [vmem:[#allocation2 + $0xc1] sm:$0xff]
    %v350 = vld [vmem:[#allocation2 + $0xd1] sm:$0xff]
    %v351 = vld [vmem:[#allocation2 + $0xe1] sm:$0xff]
    %v352 = vld [vmem:[#allocation2 + $0xf1] sm:$0xff]
    %v353 = vld [vmem:[#allocation2 + $0x101] sm:$0xff]
    %v354 = vld [vmem:[#allocation2 + $0x111] sm:$0xff]
    %v355 = vld [vmem:[#allocation2 + $0x2] sm:$0xff]
    %v356 = vld [vmem:[#allocation2 + $0x12] sm:$0xff]
    %v357 = vld [vmem:[#allocation2 + $0x22] sm:$0xff]
    %v358 = vld [vmem:[#allocation2 + $0x32] sm:$0xff]
    %v359 = vld [vmem:[#allocation2 + $0x42] sm:$0xff]
    %v360 = vld [vmem:[#allocation2 + $0x52] sm:$0xff]
    %v361 = vld [vmem:[#allocation2 + $0x62] sm:$0xff]
    %v362 = vld [vmem:[#allocation2 + $0x72] sm:$0xff]
    %v363 = vld [vmem:[#allocation2 + $0xa2] sm:$0xff]
    %v364 = vld [vmem:[#allocation2 + $0xb2] sm:$0xff]
    %v365 = vld [vmem:[#allocation2 + $0xc2] sm:$0xff]
    %v366 = vld [vmem:[#allocation2 + $0xd2] sm:$0xff]
    %v367 = vld [vmem:[#allocation2 + $0xe2] sm:$0xff]
    %v368 = vld [vmem:[#allocation2 + $0xf2] sm:$0xff]
    %v369 = vld [vmem:[#allocation2 + $0x102] sm:$0xff]
    %v370 = vld [vmem:[#allocation2 + $0x112] sm:$0xff]
    %v371 = vld [vmem:[%s273] sm:$0xff]
    %v372 = vld [vmem:[%s273 + $0x10] sm:$0xff]
    %v373 = vld [vmem:[%s273 + $0x20] sm:$0xff]
    %v374 = vld [vmem:[%s273 + $0x30] sm:$0xff]
    %v375 = vld [vmem:[%s273 + $0x40] sm:$0xff]
    %v376 = vld [vmem:[%s273 + $0x50] sm:$0xff]
    %v377 = vld [vmem:[%s273 + $0x60] sm:$0xff]
    %v378 = vld [vmem:[%s273 + $0x70] sm:$0xff]
    %v379 = vld [vmem:[%s273 + $0xa0] sm:$0xff]
    %v380 = vld [vmem:[%s273 + $0xb0] sm:$0xff]
    %v381 = vld [vmem:[%s273 + $0xc0] sm:$0xff]
    %v382 = vld [vmem:[%s273 + $0xd0] sm:$0xff]
    %v383 = vld [vmem:[%s273 + $0xe0] sm:$0xff]
    %v384 = vld [vmem:[%s273 + $0xf0] sm:$0xff]
    %v385 = vld [vmem:[%s273 + $0x100] sm:$0xff]
    %v386 = vld [vmem:[%s273 + $0x110] sm:$0xff]
    %v387 = vld [vmem:[%s273 + $0x1] sm:$0xff]
    %v388 = vld [vmem:[%s273 + $0x11] sm:$0xff]
    %v389 = vld [vmem:[%s273 + $0x21] sm:$0xff]
    %v390 = vld [vmem:[%s273 + $0x31] sm:$0xff]
    %v391 = vld [vmem:[%s273 + $0x41] sm:$0xff]
    %v392 = vld [vmem:[%s273 + $0x51] sm:$0xff]
    %v393 = vld [vmem:[%s273 + $0x61] sm:$0xff]
    %v394 = vld [vmem:[%s273 + $0x71] sm:$0xff]
    %v395 = vld [vmem:[%s273 + $0xa1] sm:$0xff]
    %v396 = vld [vmem:[%s273 + $0xb1] sm:$0xff]
    %v397 = vld [vmem:[%s273 + $0xc1] sm:$0xff]
    %v398 = vld [vmem:[%s273 + $0xd1] sm:$0xff]
    %v399 = vld [vmem:[%s273 + $0xe1] sm:$0xff]
    %v400 = vld [vmem:[%s273 + $0xf1] sm:$0xff]
    %v401 = vld [vmem:[%s273 + $0x101] sm:$0xff]
    %v402 = vld [vmem:[%s273 + $0x111] sm:$0xff]
    %v403 = vld [vmem:[%s273 + $0x2] sm:$0xff]
    %v404 = vld [vmem:[%s273 + $0x12] sm:$0xff]
    %v405 = vld [vmem:[%s273 + $0x22] sm:$0xff]
    %v406 = vld [vmem:[%s273 + $0x32] sm:$0xff]
    %v407 = vld [vmem:[%s273 + $0x42] sm:$0xff]
    %v408 = vld [vmem:[%s273 + $0x52] sm:$0xff]
    %v409 = vld [vmem:[%s273 + $0x62] sm:$0xff]
    %v410 = vld [vmem:[%s273 + $0x72] sm:$0xff]
    %v411 = vld [vmem:[%s273 + $0xa2] sm:$0xff]
    %v412 = vld [vmem:[%s273 + $0xb2] sm:$0xff]
    %v413 = vld [vmem:[%s273 + $0xc2] sm:$0xff]
    %v414 = vld [vmem:[%s273 + $0xd2] sm:$0xff]
    %v415 = vld [vmem:[%s273 + $0xe2] sm:$0xff]
    %v416 = vld [vmem:[%s273 + $0xf2] sm:$0xff]
    %v417 = vld [vmem:[%s273 + $0x102] sm:$0xff]
    %v418 = vld [vmem:[%s273 + $0x112] sm:$0xff]
    %s419 = scalar_lea.vmem [#allocation2], 32
    %v420 = vld [vmem:[%s419] sm:$0xff]
    %v421 = vld [vmem:[%s419 + $0x10] sm:$0xff]
    %v422 = vld [vmem:[%s419 + $0x20] sm:$0xff]
    %v423 = vld [vmem:[%s419 + $0x30] sm:$0xff]
    %v424 = vld [vmem:[%s419 + $0x40] sm:$0xff]
    %v425 = vld [vmem:[%s419 + $0x50] sm:$0xff]
    %v426 = vld [vmem:[%s419 + $0x60] sm:$0xff]
    %v427 = vld [vmem:[%s419 + $0x70] sm:$0xff]
    %v428 = vld [vmem:[%s419 + $0xa0] sm:$0xff]
    %v429 = vld [vmem:[%s419 + $0xb0] sm:$0xff]
    %v430 = vld [vmem:[%s419 + $0xc0] sm:$0xff]
    %v431 = vld [vmem:[%s419 + $0xd0] sm:$0xff]
    %v432 = vld [vmem:[%s419 + $0xe0] sm:$0xff]
    %v433 = vld [vmem:[%s419 + $0xf0] sm:$0xff]
    %v434 = vld [vmem:[%s419 + $0x100] sm:$0xff]
    %v435 = vld [vmem:[%s419 + $0x110] sm:$0xff]
    %v436 = vld [vmem:[%s419 + $0x1] sm:$0xff]
    %v437 = vld [vmem:[%s419 + $0x11] sm:$0xff]
    %v438 = vld [vmem:[%s419 + $0x21] sm:$0xff]
    %v439 = vld [vmem:[%s419 + $0x31] sm:$0xff]
    %v440 = vld [vmem:[%s419 + $0x41] sm:$0xff]
    %v441 = vld [vmem:[%s419 + $0x51] sm:$0xff]
    %v442 = vld [vmem:[%s419 + $0x61] sm:$0xff]
    %v443 = vld [vmem:[%s419 + $0x71] sm:$0xff]
    %v444 = vld [vmem:[%s419 + $0xa1] sm:$0xff]
    %v445 = vld [vmem:[%s419 + $0xb1] sm:$0xff]
    %v446 = vld [vmem:[%s419 + $0xc1] sm:$0xff]
    %v447 = vld [vmem:[%s419 + $0xd1] sm:$0xff]
    %v448 = vld [vmem:[%s419 + $0xe1] sm:$0xff]
    %v449 = vld [vmem:[%s419 + $0xf1] sm:$0xff]
    %v450 = vld [vmem:[%s419 + $0x101] sm:$0xff]
    %v451 = vld [vmem:[%s419 + $0x111] sm:$0xff]
    %v452 = vld [vmem:[%s419 + $0x2] sm:$0xff]
    %v453 = vld [vmem:[%s419 + $0x12] sm:$0xff]
    %v454 = vld [vmem:[%s419 + $0x22] sm:$0xff]
    %v455 = vld [vmem:[%s419 + $0x32] sm:$0xff]
    %v456 = vld [vmem:[%s419 + $0x42] sm:$0xff]
    %v457 = vld [vmem:[%s419 + $0x52] sm:$0xff]
    %v458 = vld [vmem:[%s419 + $0x62] sm:$0xff]
    %v459 = vld [vmem:[%s419 + $0x72] sm:$0xff]
    %v460 = vld [vmem:[%s419 + $0xa2] sm:$0xff]
    %v461 = vld [vmem:[%s419 + $0xb2] sm:$0xff]
    %v462 = vld [vmem:[%s419 + $0xc2] sm:$0xff]
    %v463 = vld [vmem:[%s419 + $0xd2] sm:$0xff]
    %v464 = vld [vmem:[%s419 + $0xe2] sm:$0xff]
    %v465 = vld [vmem:[%s419 + $0xf2] sm:$0xff]
    %v466 = vld [vmem:[%s419 + $0x102] sm:$0xff]
    %v467 = vld [vmem:[%s419 + $0x112] sm:$0xff]
    %484 = vrot.lane.b32.xlu0 %v339, 32
    %v485 = vpop.permute.xlu0 %484
    %486 = vrot.lane.b32.xlu0 %v340, 32
    %v487 = vpop.permute.xlu0 %486
    %488 = vrot.lane.b32.xlu0 %v341, 32
    %v489 = vpop.permute.xlu0 %488
    %490 = vrot.lane.b32.xlu0 %v342, 32
    %v491 = vpop.permute.xlu0 %490
    %492 = vrot.lane.b32.xlu0 %v343, 32
    %v493 = vpop.permute.xlu0 %492
    %494 = vrot.lane.b32.xlu0 %v344, 32
    %v495 = vpop.permute.xlu0 %494
    %496 = vrot.lane.b32.xlu0 %v345, 32
    %v497 = vpop.permute.xlu0 %496
    %498 = vrot.lane.b32.xlu0 %v346, 32
    %v499 = vpop.permute.xlu0 %498
    %500 = vrot.lane.b32.xlu0 %v347, 32
    %v501 = vpop.permute.xlu0 %500
    %502 = vrot.lane.b32.xlu0 %v348, 32
    %v503 = vpop.permute.xlu0 %502
    %504 = vrot.lane.b32.xlu0 %v349, 32
    %v505 = vpop.permute.xlu0 %504
    %506 = vrot.lane.b32.xlu0 %v350, 32
    %v507 = vpop.permute.xlu0 %506
    %508 = vrot.lane.b32.xlu0 %v351, 32
    %v509 = vpop.permute.xlu0 %508
    %510 = vrot.lane.b32.xlu0 %v352, 32
    %v511 = vpop.permute.xlu0 %510
    %512 = vrot.lane.b32.xlu0 %v353, 32
    %v513 = vpop.permute.xlu0 %512
    %514 = vrot.lane.b32.xlu0 %v354, 32
    %v515 = vpop.permute.xlu0 %514
    %548 = vrot.lane.b32.xlu0 %v355, 64
    %v549 = vpop.permute.xlu0 %548
    %550 = vrot.lane.b32.xlu0 %v356, 64
    %v551 = vpop.permute.xlu0 %550
    %552 = vrot.lane.b32.xlu0 %v357, 64
    %v553 = vpop.permute.xlu0 %552
    %554 = vrot.lane.b32.xlu0 %v358, 64
    %v555 = vpop.permute.xlu0 %554
    %556 = vrot.lane.b32.xlu0 %v359, 64
    %v557 = vpop.permute.xlu0 %556
    %558 = vrot.lane.b32.xlu0 %v360, 64
    %v559 = vpop.permute.xlu0 %558
    %560 = vrot.lane.b32.xlu0 %v361, 64
    %v561 = vpop.permute.xlu0 %560
    %562 = vrot.lane.b32.xlu0 %v362, 64
    %v563 = vpop.permute.xlu0 %562
    %564 = vrot.lane.b32.xlu0 %v363, 64
    %v565 = vpop.permute.xlu0 %564
    %566 = vrot.lane.b32.xlu0 %v364, 64
    %v567 = vpop.permute.xlu0 %566
    %568 = vrot.lane.b32.xlu0 %v365, 64
    %v569 = vpop.permute.xlu0 %568
    %570 = vrot.lane.b32.xlu0 %v366, 64
    %v571 = vpop.permute.xlu0 %570
    %572 = vrot.lane.b32.xlu0 %v367, 64
    %v573 = vpop.permute.xlu0 %572
    %574 = vrot.lane.b32.xlu0 %v368, 64
    %v575 = vpop.permute.xlu0 %574
    %576 = vrot.lane.b32.xlu0 %v369, 64
    %v577 = vpop.permute.xlu0 %576
    %578 = vrot.lane.b32.xlu0 %v370, 64
    %v579 = vpop.permute.xlu0 %578
    %612 = vrot.lane.b32.xlu0 %v371, 96
    %v613 = vpop.permute.xlu0 %612
    %614 = vrot.lane.b32.xlu0 %v372, 96
    %v615 = vpop.permute.xlu0 %614
    %616 = vrot.lane.b32.xlu0 %v373, 96
    %v617 = vpop.permute.xlu0 %616
    %618 = vrot.lane.b32.xlu0 %v374, 96
    %v619 = vpop.permute.xlu0 %618
    %620 = vrot.lane.b32.xlu0 %v375, 96
    %v621 = vpop.permute.xlu0 %620
    %622 = vrot.lane.b32.xlu0 %v376, 96
    %v623 = vpop.permute.xlu0 %622
    %624 = vrot.lane.b32.xlu0 %v377, 96
    %v625 = vpop.permute.xlu0 %624
    %626 = vrot.lane.b32.xlu0 %v378, 96
    %v627 = vpop.permute.xlu0 %626
    %628 = vrot.lane.b32.xlu0 %v379, 96
    %v629 = vpop.permute.xlu0 %628
    %630 = vrot.lane.b32.xlu0 %v380, 96
    %v631 = vpop.permute.xlu0 %630
    %632 = vrot.lane.b32.xlu0 %v381, 96
    %v633 = vpop.permute.xlu0 %632
    %634 = vrot.lane.b32.xlu0 %v382, 96
    %v635 = vpop.permute.xlu0 %634
    %636 = vrot.lane.b32.xlu0 %v383, 96
    %v637 = vpop.permute.xlu0 %636
    %638 = vrot.lane.b32.xlu0 %v384, 96
    %v639 = vpop.permute.xlu0 %638
    %640 = vrot.lane.b32.xlu0 %v385, 96
    %v641 = vpop.permute.xlu0 %640
    %642 = vrot.lane.b32.xlu0 %v386, 96
    %v643 = vpop.permute.xlu0 %642
    %676 = vrot.lane.b32.xlu0 %v403, 32
    %v677 = vpop.permute.xlu0 %676
    %678 = vrot.lane.b32.xlu0 %v404, 32
    %v679 = vpop.permute.xlu0 %678
    %680 = vrot.lane.b32.xlu0 %v405, 32
    %v681 = vpop.permute.xlu0 %680
    %682 = vrot.lane.b32.xlu0 %v406, 32
    %v683 = vpop.permute.xlu0 %682
    %684 = vrot.lane.b32.xlu0 %v407, 32
    %v685 = vpop.permute.xlu0 %684
    %686 = vrot.lane.b32.xlu0 %v408, 32
    %v687 = vpop.permute.xlu0 %686
    %688 = vrot.lane.b32.xlu0 %v409, 32
    %v689 = vpop.permute.xlu0 %688
    %690 = vrot.lane.b32.xlu0 %v410, 32
    %v691 = vpop.permute.xlu0 %690
    %692 = vrot.lane.b32.xlu0 %v411, 32
    %v693 = vpop.permute.xlu0 %692
    %694 = vrot.lane.b32.xlu0 %v412, 32
    %v695 = vpop.permute.xlu0 %694
    %696 = vrot.lane.b32.xlu0 %v413, 32
    %v697 = vpop.permute.xlu0 %696
    %698 = vrot.lane.b32.xlu0 %v414, 32
    %v699 = vpop.permute.xlu0 %698
    %700 = vrot.lane.b32.xlu0 %v415, 32
    %v701 = vpop.permute.xlu0 %700
    %702 = vrot.lane.b32.xlu0 %v416, 32
    %v703 = vpop.permute.xlu0 %702
    %704 = vrot.lane.b32.xlu0 %v417, 32
    %v705 = vpop.permute.xlu0 %704
    %706 = vrot.lane.b32.xlu0 %v418, 32
    %v707 = vpop.permute.xlu0 %706
    %740 = vrot.lane.b32.xlu0 %v420, 64
    %v741 = vpop.permute.xlu0 %740
    %742 = vrot.lane.b32.xlu0 %v421, 64
    %v743 = vpop.permute.xlu0 %742
    %744 = vrot.lane.b32.xlu0 %v422, 64
    %v745 = vpop.permute.xlu0 %744
    %746 = vrot.lane.b32.xlu0 %v423, 64
    %v747 = vpop.permute.xlu0 %746
    %748 = vrot.lane.b32.xlu0 %v424, 64
    %v749 = vpop.permute.xlu0 %748
    %750 = vrot.lane.b32.xlu0 %v425, 64
    %v751 = vpop.permute.xlu0 %750
    %752 = vrot.lane.b32.xlu0 %v426, 64
    %v753 = vpop.permute.xlu0 %752
    %754 = vrot.lane.b32.xlu0 %v427, 64
    %v755 = vpop.permute.xlu0 %754
    %756 = vrot.lane.b32.xlu0 %v428, 64
    %v757 = vpop.permute.xlu0 %756
    %758 = vrot.lane.b32.xlu0 %v429, 64
    %v759 = vpop.permute.xlu0 %758
    %760 = vrot.lane.b32.xlu0 %v430, 64
    %v761 = vpop.permute.xlu0 %760
    %762 = vrot.lane.b32.xlu0 %v431, 64
    %v763 = vpop.permute.xlu0 %762
    %764 = vrot.lane.b32.xlu0 %v432, 64
    %v765 = vpop.permute.xlu0 %764
    %766 = vrot.lane.b32.xlu0 %v433, 64
    %v767 = vpop.permute.xlu0 %766
    %768 = vrot.lane.b32.xlu0 %v434, 64
    %v769 = vpop.permute.xlu0 %768
    %770 = vrot.lane.b32.xlu0 %v435, 64
    %v771 = vpop.permute.xlu0 %770
    %804 = vrot.lane.b32.xlu0 %v436, 96
    %v805 = vpop.permute.xlu0 %804
    %806 = vrot.lane.b32.xlu0 %v437, 96
    %v807 = vpop.permute.xlu0 %806
    %808 = vrot.lane.b32.xlu0 %v438, 96
    %v809 = vpop.permute.xlu0 %808
    %810 = vrot.lane.b32.xlu0 %v439, 96
    %v811 = vpop.permute.xlu0 %810
    %812 = vrot.lane.b32.xlu0 %v440, 96
    %v813 = vpop.permute.xlu0 %812
    %814 = vrot.lane.b32.xlu0 %v441, 96
    %v815 = vpop.permute.xlu0 %814
    %816 = vrot.lane.b32.xlu0 %v442, 96
    %v817 = vpop.permute.xlu0 %816
    %818 = vrot.lane.b32.xlu0 %v443, 96
    %v819 = vpop.permute.xlu0 %818
    %820 = vrot.lane.b32.xlu0 %v444, 96
    %v821 = vpop.permute.xlu0 %820
    %822 = vrot.lane.b32.xlu0 %v445, 96
    %v823 = vpop.permute.xlu0 %822
    %824 = vrot.lane.b32.xlu0 %v446, 96
    %v825 = vpop.permute.xlu0 %824
    %826 = vrot.lane.b32.xlu0 %v447, 96
    %v827 = vpop.permute.xlu0 %826
    %828 = vrot.lane.b32.xlu0 %v448, 96
    %v829 = vpop.permute.xlu0 %828
    %830 = vrot.lane.b32.xlu0 %v449, 96
    %v831 = vpop.permute.xlu0 %830
    %832 = vrot.lane.b32.xlu0 %v450, 96
    %v833 = vpop.permute.xlu0 %832
    %834 = vrot.lane.b32.xlu0 %v451, 96
    %v835 = vpop.permute.xlu0 %834
    %v852 = vsel %vm262, %v323, %v485
    %v853 = vsel %vm262, %v324, %v487
    %v854 = vsel %vm262, %v325, %v489
    %v855 = vsel %vm262, %v326, %v491
    %v856 = vsel %vm262, %v327, %v493
    %v857 = vsel %vm262, %v328, %v495
    %v858 = vsel %vm262, %v329, %v497
    %v859 = vsel %vm262, %v330, %v499
    %v860 = vsel %vm262, %v331, %v501
    %v861 = vsel %vm262, %v332, %v503
    %v862 = vsel %vm262, %v333, %v505
    %v863 = vsel %vm262, %v334, %v507
    %v864 = vsel %vm262, %v335, %v509
    %v865 = vsel %vm262, %v336, %v511
    %v866 = vsel %vm262, %v337, %v513
    %v867 = vsel %vm262, %v338, %v515
    %vm868 = vcmask 523264
    %v869 = vsel %vm868, %v852, %v549
    %v870 = vsel %vm868, %v853, %v551
    %v871 = vsel %vm868, %v854, %v553
    %v872 = vsel %vm868, %v855, %v555
    %v873 = vsel %vm868, %v856, %v557
    %v874 = vsel %vm868, %v857, %v559
    %v875 = vsel %vm868, %v858, %v561
    %v876 = vsel %vm868, %v859, %v563
    %v877 = vsel %vm868, %v860, %v565
    %v878 = vsel %vm868, %v861, %v567
    %v879 = vsel %vm868, %v862, %v569
    %v880 = vsel %vm868, %v863, %v571
    %v881 = vsel %vm868, %v864, %v573
    %v882 = vsel %vm868, %v865, %v575
    %v883 = vsel %vm868, %v866, %v577
    %v884 = vsel %vm868, %v867, %v579
    %vm885 = vcmask 785408
    %v886 = vsel %vm885, %v869, %v613
    %v887 = vsel %vm885, %v870, %v615
    %v888 = vsel %vm885, %v871, %v617
    %v889 = vsel %vm885, %v872, %v619
    %v890 = vsel %vm885, %v873, %v621
    %v891 = vsel %vm885, %v874, %v623
    %v892 = vsel %vm885, %v875, %v625
    %v893 = vsel %vm885, %v876, %v627
    %v894 = vsel %vm885, %v877, %v629
    %v895 = vsel %vm885, %v878, %v631
    %v896 = vsel %vm885, %v879, %v633
    %v897 = vsel %vm885, %v880, %v635
    %v898 = vsel %vm885, %v881, %v637
    %v899 = vsel %vm885, %v882, %v639
    %v900 = vsel %vm885, %v883, %v641
    %v901 = vsel %vm885, %v884, %v643
    %v902 = vsel %vm262, %v387, %v677
    %v903 = vsel %vm262, %v388, %v679
    %v904 = vsel %vm262, %v389, %v681
    %v905 = vsel %vm262, %v390, %v683
    %v906 = vsel %vm262, %v391, %v685
    %v907 = vsel %vm262, %v392, %v687
    %v908 = vsel %vm262, %v393, %v689
    %v909 = vsel %vm262, %v394, %v691
    %v910 = vsel %vm262, %v395, %v693
    %v911 = vsel %vm262, %v396, %v695
    %v912 = vsel %vm262, %v397, %v697
    %v913 = vsel %vm262, %v398, %v699
    %v914 = vsel %vm262, %v399, %v701
    %v915 = vsel %vm262, %v400, %v703
    %v916 = vsel %vm262, %v401, %v705
    %v917 = vsel %vm262, %v402, %v707
    %v918 = vsel %vm868, %v902, %v741
    %v919 = vsel %vm868, %v903, %v743
    %v920 = vsel %vm868, %v904, %v745
    %v921 = vsel %vm868, %v905, %v747
    %v922 = vsel %vm868, %v906, %v749
    %v923 = vsel %vm868, %v907, %v751
    %v924 = vsel %vm868, %v908, %v753
    %v925 = vsel %vm868, %v909, %v755
    %v926 = vsel %vm868, %v910, %v757
    %v927 = vsel %vm868, %v911, %v759
    %v928 = vsel %vm868, %v912, %v761
    %v929 = vsel %vm868, %v913, %v763
    %v930 = vsel %vm868, %v914, %v765
    %v931 = vsel %vm868, %v915, %v767
    %v932 = vsel %vm868, %v916, %v769
    %v933 = vsel %vm868, %v917, %v771
    %v934 = vsel %vm885, %v918, %v805
    %v935 = vsel %vm885, %v919, %v807
    %v936 = vsel %vm885, %v920, %v809
    %v937 = vsel %vm885, %v921, %v811
    %v938 = vsel %vm885, %v922, %v813
    %v939 = vsel %vm885, %v923, %v815
    %v940 = vsel %vm885, %v924, %v817
    %v941 = vsel %vm885, %v925, %v819
    %v942 = vsel %vm885, %v926, %v821
    %v943 = vsel %vm885, %v927, %v823
    %v944 = vsel %vm885, %v928, %v825
    %v945 = vsel %vm885, %v929, %v827
    %v946 = vsel %vm885, %v930, %v829
    %v947 = vsel %vm885, %v931, %v831
    %v948 = vsel %vm885, %v932, %v833
    %v949 = vsel %vm885, %v933, %v835
    %v950 = vld [vmem:[%s3] sm:$0xff]
    %v951 = vld [vmem:[%s3 + $0x8] sm:$0xff]
    %v952 = vld [vmem:[%s3 + $0x10] sm:$0xff]
    %v953 = vld [vmem:[%s3 + $0x18] sm:$0xff]
    %v954 = vld [vmem:[%s3 + $0x20] sm:$0xff]
    %v955 = vld [vmem:[%s3 + $0x28] sm:$0xff]
    %v956 = vld [vmem:[%s3 + $0x30] sm:$0xff]
    %v957 = vld [vmem:[%s3 + $0x38] sm:$0xff]
    %v958 = vld [vmem:[%s3 + $0x40] sm:$0xff]
    %v959 = vld [vmem:[%s3 + $0x48] sm:$0xff]
    %v960 = vld [vmem:[%s3 + $0x50] sm:$0xff]
    %v961 = vld [vmem:[%s3 + $0x58] sm:$0xff]
    %v962 = vld [vmem:[%s3 + $0x60] sm:$0xff]
    %v963 = vld [vmem:[%s3 + $0x68] sm:$0xff]
    %v964 = vld [vmem:[%s3 + $0x70] sm:$0xff]
    %v965 = vld [vmem:[%s3 + $0x78] sm:$0xff]
    %v966 = vld [vmem:[%s3 + $0x80] sm:$0xff]
    %v967 = vld [vmem:[%s3 + $0x88] sm:$0xff]
    %v968 = vld [vmem:[%s3 + $0x90] sm:$0xff]
    %v969 = vld [vmem:[%s3 + $0x98] sm:$0xff]
    %v970 = vld [vmem:[%s3 + $0xa0] sm:$0xff]
    %v971 = vld [vmem:[%s3 + $0xa8] sm:$0xff]
    %v972 = vld [vmem:[%s3 + $0xb0] sm:$0xff]
    %v973 = vld [vmem:[%s3 + $0xb8] sm:$0xff]
    %v974 = vld [vmem:[%s3 + $0xc0] sm:$0xff]
    %v975 = vld [vmem:[%s3 + $0xc8] sm:$0xff]
    %v976 = vld [vmem:[%s3 + $0xd0] sm:$0xff]
    %v977 = vld [vmem:[%s3 + $0xd8] sm:$0xff]
    %v978 = vld [vmem:[%s3 + $0xe0] sm:$0xff]
    %v979 = vld [vmem:[%s3 + $0xe8] sm:$0xff]
    %v980 = vld [vmem:[%s3 + $0xf0] sm:$0xff]
    %v981 = vld [vmem:[%s3 + $0xf8] sm:$0xff]
    %v982 = vld [vmem:[%s3 + $0x100] sm:$0xff]
    %v983 = vld [vmem:[%s3 + $0x108] sm:$0xff]
    %v984 = vld [vmem:[%s3 + $0x110] sm:$0xff]
    %v985 = vld [vmem:[%s3 + $0x118] sm:$0xff]
    %v986 = vld [vmem:[%s4] sm:$0x1]
    %v988 = vlaneseq
    %v989 = vshrl.u32 %v988, 7
    %v990 = vsub.s32 0, %v989
    %v991 = vrot.slane %v986, %v990
    %v994 = vsel %vm262, %v452, 0
    %v997 = vsel %vm262, %v453, 0
    %v1000 = vsel %vm262, %v454, 0
    %v1003 = vsel %vm262, %v455, 0
    %v1006 = vsel %vm262, %v456, 0
    %v1009 = vsel %vm262, %v457, 0
    %v1012 = vsel %vm262, %v458, 0
    %v1015 = vsel %vm262, %v459, 0
    %v1018 = vsel %vm262, %v460, 0
    %v1021 = vsel %vm262, %v461, 0
    %v1024 = vsel %vm262, %v462, 0
    %v1027 = vsel %vm262, %v463, 0
    %v1030 = vsel %vm262, %v464, 0
    %v1033 = vsel %vm262, %v465, 0
    %v1036 = vsel %vm262, %v466, 0
    %v1039 = vsel %vm262, %v467, 0
    %1041 = vmatprep.subr.mxu0 0.0
    %1042 = vmatpush1.msra.mxu0 %v965
    %1043 = vmatprep.subr.mxu0 0.0
    %1044 = vmatpush1.msra.mxu0 %v964
    %1045 = vmatprep.subr.mxu0 0.0
    %1046 = vmatpush1.msra.mxu0 %v963
    %1047 = vmatprep.subr.mxu0 0.0
    %1048 = vmatpush1.msra.mxu0 %v962
    %1049 = vmatprep.subr.mxu0 0.0
    %1050 = vmatpush1.msra.mxu0 %v961
    %1051 = vmatprep.subr.mxu0 0.0
    %1052 = vmatpush1.msra.mxu0 %v960
    %1053 = vmatprep.subr.mxu0 0.0
    %1054 = vmatpush1.msra.mxu0 %v959
    %1055 = vmatprep.subr.mxu0 0.0
    %1056 = vmatpush1.msra.mxu0 %v958
    %1057 = vmatprep.subr.mxu0 0.0
    %1058 = vmatpush1.msra.mxu0 %v957
    %1059 = vmatprep.subr.mxu0 0.0
    %1060 = vmatpush1.msra.mxu0 %v956
    %1061 = vmatprep.subr.mxu0 0.0
    %1062 = vmatpush1.msra.mxu0 %v955
    %1063 = vmatprep.subr.mxu0 0.0
    %1064 = vmatpush1.msra.mxu0 %v954
    %1065 = vmatprep.subr.mxu0 0.0
    %1066 = vmatpush1.msra.mxu0 %v953
    %1067 = vmatprep.subr.mxu0 0.0
    %1068 = vmatpush1.msra.mxu0 %v952
    %1069 = vmatprep.subr.mxu0 0.0
    %1070 = vmatpush1.msra.mxu0 %v951
    %1071 = vmatprep.subr.mxu0 0.0
    %1072 = vmatpush1.msra.mxu0 %v950
    %1073 = vmatprep.subr.mxu0 0.0
    %1074 = vmatpush2.msra.mxu0 %v981
    %1075 = vmatprep.subr.mxu0 0.0
    %1076 = vmatpush2.msra.mxu0 %v980
    %1077 = vmatprep.subr.mxu0 0.0
    %1078 = vmatpush2.msra.mxu0 %v979
    %1079 = vmatprep.subr.mxu0 0.0
    %1080 = vmatpush2.msra.mxu0 %v978
    %1081 = vmatprep.subr.mxu0 0.0
    %1082 = vmatpush2.msra.mxu0 %v977
    %1083 = vmatprep.subr.mxu0 0.0
    %1084 = vmatpush2.msra.mxu0 %v976
    %1085 = vmatprep.subr.mxu0 0.0
    %1086 = vmatpush2.msra.mxu0 %v975
    %1087 = vmatprep.subr.mxu0 0.0
    %1088 = vmatpush2.msra.mxu0 %v974
    %1089 = vmatprep.subr.mxu0 0.0
    %1090 = vmatpush2.msra.mxu0 %v973
    %1091 = vmatprep.subr.mxu0 0.0
    %1092 = vmatpush2.msra.mxu0 %v972
    %1093 = vmatprep.subr.mxu0 0.0
    %1094 = vmatpush2.msra.mxu0 %v971
    %1095 = vmatprep.subr.mxu0 0.0
    %1096 = vmatpush2.msra.mxu0 %v970
    %1097 = vmatprep.subr.mxu0 0.0
    %1098 = vmatpush2.msra.mxu0 %v969
    %1099 = vmatprep.subr.mxu0 0.0
    %1100 = vmatpush2.msra.mxu0 %v968
    %1101 = vmatprep.subr.mxu0 0.0
    %1102 = vmatpush2.msra.mxu0 %v967
    %1103 = vmatprep.subr.mxu0 0.0
    %1104 = vmatpush2.msra.mxu0 %v966
    %1105 = vmatprep.mubr.f32.mxu0 %v934
    %1106 = vmatmul.mubr.f32.gmra.mxu0 %v886
    %v1107 = vpop.f32.mrf.mxu0
    %v1108 = vadd.f32 %v991, %v1107
    %v1109 = vpop.f32.mrf.mxu0
    %1110 = vmatprep.mubr.f32.mxu0 %v935
    %1111 = vmatmul.mubr.f32.gmra.mxu0 %v887
    %v1112 = vpop.f32.mrf.mxu0
    %v1113 = vadd.f32 %v991, %v1112
    %v1114 = vpop.f32.mrf.mxu0
    %1115 = vmatprep.mubr.f32.mxu0 %v936
    %1116 = vmatmul.mubr.f32.gmra.mxu0 %v888
    %v1117 = vpop.f32.mrf.mxu0
    %v1118 = vadd.f32 %v991, %v1117
    %v1119 = vpop.f32.mrf.mxu0
    %1120 = vmatprep.mubr.f32.mxu0 %v937
    %1121 = vmatmul.mubr.f32.gmra.mxu0 %v889
    %v1122 = vpop.f32.mrf.mxu0
    %v1123 = vadd.f32 %v991, %v1122
    %v1124 = vpop.f32.mrf.mxu0
    %1125 = vmatprep.mubr.f32.mxu0 %v938
    %1126 = vmatmul.mubr.f32.gmra.mxu0 %v890
    %v1127 = vpop.f32.mrf.mxu0
    %v1128 = vadd.f32 %v991, %v1127
    %v1129 = vpop.f32.mrf.mxu0
    %1130 = vmatprep.mubr.f32.mxu0 %v939
    %1131 = vmatmul.mubr.f32.gmra.mxu0 %v891
    %v1132 = vpop.f32.mrf.mxu0
    %v1133 = vadd.f32 %v991, %v1132
    %v1134 = vpop.f32.mrf.mxu0
    %1135 = vmatprep.mubr.f32.mxu0 %v940
    %1136 = vmatmul.mubr.f32.gmra.mxu0 %v892
    %v1137 = vpop.f32.mrf.mxu0
    %v1138 = vadd.f32 %v991, %v1137
    %v1139 = vpop.f32.mrf.mxu0
    %1140 = vmatprep.mubr.f32.mxu0 %v941
    %1141 = vmatmul.mubr.f32.gmra.mxu0 %v893
    %v1142 = vpop.f32.mrf.mxu0
    %v1143 = vadd.f32 %v991, %v1142
    %v1144 = vpop.f32.mrf.mxu0
    %1145 = vmatprep.mubr.f32.mxu0 %v942
    %1146 = vmatmul.mubr.f32.gmra.mxu0 %v894
    %v1147 = vpop.f32.mrf.mxu0
    %v1148 = vadd.f32 %v991, %v1147
    %v1149 = vpop.f32.mrf.mxu0
    %1150 = vmatprep.mubr.f32.mxu0 %v943
    %1151 = vmatmul.mubr.f32.gmra.mxu0 %v895
    %v1152 = vpop.f32.mrf.mxu0
    %v1153 = vadd.f32 %v991, %v1152
    %v1154 = vpop.f32.mrf.mxu0
    %1155 = vmatprep.mubr.f32.mxu0 %v944
    %1156 = vmatmul.mubr.f32.gmra.mxu0 %v896
    %v1157 = vpop.f32.mrf.mxu0
    %v1158 = vadd.f32 %v991, %v1157
    %v1159 = vpop.f32.mrf.mxu0
    %1160 = vmatprep.mubr.f32.mxu0 %v945
    %1161 = vmatmul.mubr.f32.gmra.mxu0 %v897
    %v1162 = vpop.f32.mrf.mxu0
    %v1163 = vadd.f32 %v991, %v1162
    %v1164 = vpop.f32.mrf.mxu0
    %1165 = vmatprep.mubr.f32.mxu0 %v946
    %1166 = vmatmul.mubr.f32.gmra.mxu0 %v898
    %v1167 = vpop.f32.mrf.mxu0
    %v1168 = vadd.f32 %v991, %v1167
    %v1169 = vpop.f32.mrf.mxu0
    %1170 = vmatprep.mubr.f32.mxu0 %v947
    %1171 = vmatmul.mubr.f32.gmra.mxu0 %v899
    %v1172 = vpop.f32.mrf.mxu0
    %v1173 = vadd.f32 %v991, %v1172
    %v1174 = vpop.f32.mrf.mxu0
    %1175 = vmatprep.mubr.f32.mxu0 %v948
    %1176 = vmatmul.mubr.f32.gmra.mxu0 %v900
    %v1177 = vpop.f32.mrf.mxu0
    %v1178 = vadd.f32 %v991, %v1177
    %v1179 = vpop.f32.mrf.mxu0
    %1180 = vmatprep.mubr.f32.mxu0 %v949
    %1181 = vmatmul.mubr.f32.gmra.mxu0 %v901
    %v1182 = vpop.f32.mrf.mxu0
    %v1183 = vadd.f32 %v991, %v1182
    %v1184 = vpop.f32.mrf.mxu0
    %1185 = vdwg.mxu0
    %1186 = vmatprep.subr.mxu0 0.0
    %1187 = vmatpush1.msra.mxu0 0.0
    %1188 = vmatprep.subr.mxu0 0.0
    %1189 = vmatpush1.msra.mxu0 0.0
    %1190 = vmatprep.subr.mxu0 0.0
    %1191 = vmatpush1.msra.mxu0 0.0
    %1192 = vmatprep.subr.mxu0 0.0
    %1193 = vmatpush1.msra.mxu0 0.0
    %1194 = vmatprep.subr.mxu0 0.0
    %1195 = vmatpush1.msra.mxu0 0.0
    %1196 = vmatprep.subr.mxu0 0.0
    %1197 = vmatpush1.msra.mxu0 0.0
    %1198 = vmatprep.subr.mxu0 0.0
    %1199 = vmatpush1.msra.mxu0 0.0
    %1200 = vmatprep.subr.mxu0 0.0
    %1201 = vmatpush1.msra.mxu0 0.0
    %1202 = vmatprep.subr.mxu0 0.0
    %1203 = vmatpush1.msra.mxu0 0.0
    %1204 = vmatprep.subr.mxu0 0.0
    %1205 = vmatpush1.msra.mxu0 0.0
    %1206 = vmatprep.subr.mxu0 0.0
    %1207 = vmatpush1.msra.mxu0 0.0
    %1208 = vmatprep.subr.mxu0 0.0
    %1209 = vmatpush1.msra.mxu0 0.0
    %1210 = vmatprep.subr.mxu0 0.0
    %1211 = vmatpush1.msra.mxu0 %v985
    %1212 = vmatprep.subr.mxu0 0.0
    %1213 = vmatpush1.msra.mxu0 %v984
    %1214 = vmatprep.subr.mxu0 0.0
    %1215 = vmatpush1.msra.mxu0 %v983
    %1216 = vmatprep.subr.mxu0 0.0
    %1217 = vmatpush1.msra.mxu0 %v982
    %1218 = vmatprep.subr.mxu0 0.0
    %1219 = vmatpush2.msra.mxu0 0.0
    %1220 = vmatprep.subr.mxu0 0.0
    %1221 = vmatpush2.msra.mxu0 0.0
    %1222 = vmatprep.subr.mxu0 0.0
    %1223 = vmatpush2.msra.mxu0 0.0
    %1224 = vmatprep.subr.mxu0 0.0
    %1225 = vmatpush2.msra.mxu0 0.0
    %1226 = vmatprep.subr.mxu0 0.0
    %1227 = vmatpush2.msra.mxu0 0.0
    %1228 = vmatprep.subr.mxu0 0.0
    %1229 = vmatpush2.msra.mxu0 0.0
    %1230 = vmatprep.subr.mxu0 0.0
    %1231 = vmatpush2.msra.mxu0 0.0
    %1232 = vmatprep.subr.mxu0 0.0
    %1233 = vmatpush2.msra.mxu0 0.0
    %1234 = vmatprep.subr.mxu0 0.0
    %1235 = vmatpush2.msra.mxu0 0.0
    %1236 = vmatprep.subr.mxu0 0.0
    %1237 = vmatpush2.msra.mxu0 0.0
    %1238 = vmatprep.subr.mxu0 0.0
    %1239 = vmatpush2.msra.mxu0 0.0
    %1240 = vmatprep.subr.mxu0 0.0
    %1241 = vmatpush2.msra.mxu0 0.0
    %1242 = vmatprep.subr.mxu0 0.0
    %1243 = vmatpush2.msra.mxu0 0.0
    %1244 = vmatprep.subr.mxu0 0.0
    %1245 = vmatpush2.msra.mxu0 0.0
    %1246 = vmatprep.subr.mxu0 0.0
    %1247 = vmatpush2.msra.mxu0 0.0
    %1248 = vmatprep.subr.mxu0 0.0
    %1249 = vmatpush2.msra.mxu0 0.0
    %1250 = vmatprep.mubr.f32.mxu0 0.0
    %1251 = vmatmul.mubr.f32.gmra.mxu0 %v994
    %v1252 = vpop.f32.mrf.mxu0
    %v1253 = vadd.f32 %v1108, %v1252
    %v1254 = vpop.f32.mrf.mxu0
    %1255 = vmatprep.mubr.f32.mxu0 0.0
    %1256 = vmatmul.mubr.f32.gmra.mxu0 %v997
    %v1257 = vpop.f32.mrf.mxu0
    %v1258 = vadd.f32 %v1113, %v1257
    %v1259 = vpop.f32.mrf.mxu0
    %1260 = vmatprep.mubr.f32.mxu0 0.0
    %1261 = vmatmul.mubr.f32.gmra.mxu0 %v1000
    %v1262 = vpop.f32.mrf.mxu0
    %v1263 = vadd.f32 %v1118, %v1262
    %v1264 = vpop.f32.mrf.mxu0
    %1265 = vmatprep.mubr.f32.mxu0 0.0
    %1266 = vmatmul.mubr.f32.gmra.mxu0 %v1003
    %v1267 = vpop.f32.mrf.mxu0
    %v1268 = vadd.f32 %v1123, %v1267
    %v1269 = vpop.f32.mrf.mxu0
    %1270 = vmatprep.mubr.f32.mxu0 0.0
    %1271 = vmatmul.mubr.f32.gmra.mxu0 %v1006
    %v1272 = vpop.f32.mrf.mxu0
    %v1273 = vadd.f32 %v1128, %v1272
    %v1274 = vpop.f32.mrf.mxu0
    %1275 = vmatprep.mubr.f32.mxu0 0.0
    %1276 = vmatmul.mubr.f32.gmra.mxu0 %v1009
    %v1277 = vpop.f32.mrf.mxu0
    %v1278 = vadd.f32 %v1133, %v1277
    %v1279 = vpop.f32.mrf.mxu0
    %1280 = vmatprep.mubr.f32.mxu0 0.0
    %1281 = vmatmul.mubr.f32.gmra.mxu0 %v1012
    %v1282 = vpop.f32.mrf.mxu0
    %v1283 = vadd.f32 %v1138, %v1282
    %v1284 = vpop.f32.mrf.mxu0
    %1285 = vmatprep.mubr.f32.mxu0 0.0
    %1286 = vmatmul.mubr.f32.gmra.mxu0 %v1015
    %v1287 = vpop.f32.mrf.mxu0
    %v1288 = vadd.f32 %v1143, %v1287
    %v1289 = vpop.f32.mrf.mxu0
    %1290 = vmatprep.mubr.f32.mxu0 0.0
    %1291 = vmatmul.mubr.f32.gmra.mxu0 %v1018
    %v1292 = vpop.f32.mrf.mxu0
    %v1293 = vadd.f32 %v1148, %v1292
    %v1294 = vpop.f32.mrf.mxu0
    %1295 = vmatprep.mubr.f32.mxu0 0.0
    %1296 = vmatmul.mubr.f32.gmra.mxu0 %v1021
    %v1297 = vpop.f32.mrf.mxu0
    %v1298 = vadd.f32 %v1153, %v1297
    %v1299 = vpop.f32.mrf.mxu0
    %1300 = vmatprep.mubr.f32.mxu0 0.0
    %1301 = vmatmul.mubr.f32.gmra.mxu0 %v1024
    %v1302 = vpop.f32.mrf.mxu0
    %v1303 = vadd.f32 %v1158, %v1302
    %v1304 = vpop.f32.mrf.mxu0
    %1305 = vmatprep.mubr.f32.mxu0 0.0
    %1306 = vmatmul.mubr.f32.gmra.mxu0 %v1027
    %v1307 = vpop.f32.mrf.mxu0
    %v1308 = vadd.f32 %v1163, %v1307
    %v1309 = vpop.f32.mrf.mxu0
    %1310 = vmatprep.mubr.f32.mxu0 0.0
    %1311 = vmatmul.mubr.f32.gmra.mxu0 %v1030
    %v1312 = vpop.f32.mrf.mxu0
    %v1313 = vadd.f32 %v1168, %v1312
    %v1314 = vpop.f32.mrf.mxu0
    %1315 = vmatprep.mubr.f32.mxu0 0.0
    %1316 = vmatmul.mubr.f32.gmra.mxu0 %v1033
    %v1317 = vpop.f32.mrf.mxu0
    %v1318 = vadd.f32 %v1173, %v1317
    %v1319 = vpop.f32.mrf.mxu0
    %1320 = vmatprep.mubr.f32.mxu0 0.0
    %1321 = vmatmul.mubr.f32.gmra.mxu0 %v1036
    %v1322 = vpop.f32.mrf.mxu0
    %v1323 = vadd.f32 %v1178, %v1322
    %v1324 = vpop.f32.mrf.mxu0
    %1325 = vmatprep.mubr.f32.mxu0 0.0
    %1326 = vmatmul.mubr.f32.gmra.mxu0 %v1039
    %v1327 = vpop.f32.mrf.mxu0
    %v1328 = vadd.f32 %v1183, %v1327
    %v1329 = vpop.f32.mrf.mxu0
    %1330 = vdwg.mxu0
    %v1331 = vmax.f32 %v1253, 0.0
    %v1332 = vmax.f32 %v1258, 0.0
    %v1333 = vmax.f32 %v1263, 0.0
    %v1334 = vmax.f32 %v1268, 0.0
    %v1335 = vmax.f32 %v1273, 0.0
    %v1336 = vmax.f32 %v1278, 0.0
    %v1337 = vmax.f32 %v1283, 0.0
    %v1338 = vmax.f32 %v1288, 0.0
    %v1339 = vmax.f32 %v1293, 0.0
    %v1340 = vmax.f32 %v1298, 0.0
    %v1341 = vmax.f32 %v1303, 0.0
    %v1342 = vmax.f32 %v1308, 0.0
    %v1343 = vmax.f32 %v1313, 0.0
    %v1344 = vmax.f32 %v1318, 0.0
    %v1345 = vmax.f32 %v1323, 0.0
    %v1346 = vmax.f32 %v1328, 0.0
    %1347 = vrot.lane.b32.xlu0 %v27, 32
    %v1348 = vpop.permute.xlu0 %1347
    %1349 = vrot.lane.b32.xlu0 %v28, 32
    %v1350 = vpop.permute.xlu0 %1349
    %1351 = vrot.lane.b32.xlu0 %v29, 32
    %v1352 = vpop.permute.xlu0 %1351
    %1353 = vrot.lane.b32.xlu0 %v30, 32
    %v1354 = vpop.permute.xlu0 %1353
    %1355 = vrot.lane.b32.xlu0 %v31, 32
    %v1356 = vpop.permute.xlu0 %1355
    %1357 = vrot.lane.b32.xlu0 %v32, 32
    %v1358 = vpop.permute.xlu0 %1357
    %1359 = vrot.lane.b32.xlu0 %v33, 32
    %v1360 = vpop.permute.xlu0 %1359
    %1361 = vrot.lane.b32.xlu0 %v34, 32
    %v1362 = vpop.permute.xlu0 %1361
    %1363 = vrot.lane.b32.xlu0 %v35, 32
    %v1364 = vpop.permute.xlu0 %1363
    %1365 = vrot.lane.b32.xlu0 %v36, 32
    %v1366 = vpop.permute.xlu0 %1365
    %1367 = vrot.lane.b32.xlu0 %v37, 32
    %v1368 = vpop.permute.xlu0 %1367
    %1369 = vrot.lane.b32.xlu0 %v38, 32
    %v1370 = vpop.permute.xlu0 %1369
    %1371 = vrot.lane.b32.xlu0 %v39, 32
    %v1372 = vpop.permute.xlu0 %1371
    %1373 = vrot.lane.b32.xlu0 %v40, 32
    %v1374 = vpop.permute.xlu0 %1373
    %1375 = vrot.lane.b32.xlu0 %v41, 32
    %v1376 = vpop.permute.xlu0 %1375
    %1377 = vrot.lane.b32.xlu0 %v42, 32
    %v1378 = vpop.permute.xlu0 %1377
    %v1395 = vsel %vm262, %v1331, %v1348
    %v1396 = vsel %vm262, %v1332, %v1350
    %v1397 = vsel %vm262, %v1333, %v1352
    %v1398 = vsel %vm262, %v1334, %v1354
    %v1399 = vsel %vm262, %v1335, %v1356
    %v1400 = vsel %vm262, %v1336, %v1358
    %v1401 = vsel %vm262, %v1337, %v1360
    %v1402 = vsel %vm262, %v1338, %v1362
    %v1403 = vsel %vm262, %v1339, %v1364
    %v1404 = vsel %vm262, %v1340, %v1366
    %v1405 = vsel %vm262, %v1341, %v1368
    %v1406 = vsel %vm262, %v1342, %v1370
    %v1407 = vsel %vm262, %v1343, %v1372
    %v1408 = vsel %vm262, %v1344, %v1374
    %v1409 = vsel %vm262, %v1345, %v1376
    %v1410 = vsel %vm262, %v1346, %v1378
    %v1411 = vld [vmem:[%s5] sm:$0xff]
    %v1412 = vld [vmem:[%s5 + $0x8] sm:$0xff]
    %v1413 = vld [vmem:[%s5 + $0x10] sm:$0xff]
    %v1414 = vld [vmem:[%s5 + $0x18] sm:$0xff]
    %v1415 = vld [vmem:[%s5 + $0x20] sm:$0xff]
    %v1416 = vld [vmem:[%s5 + $0x28] sm:$0xff]
    %v1417 = vld [vmem:[%s6] sm:$0x1]
    %v1419 = vlaneseq
    %v1420 = vshrl.u32 %v1419, 7
    %v1421 = vsub.s32 0, %v1420
    %v1422 = vrot.slane %v1417, %v1421
    %vm1424 = vcmask 392192
    %v1426 = vsel %vm1424, %v1395, 0
    %v1429 = vsel %vm1424, %v1396, 0
    %v1432 = vsel %vm1424, %v1397, 0
    %v1435 = vsel %vm1424, %v1398, 0
    %v1438 = vsel %vm1424, %v1399, 0
    %v1441 = vsel %vm1424, %v1400, 0
    %v1444 = vsel %vm1424, %v1401, 0
    %v1447 = vsel %vm1424, %v1402, 0
    %v1450 = vsel %vm1424, %v1403, 0
    %v1453 = vsel %vm1424, %v1404, 0
    %v1456 = vsel %vm1424, %v1405, 0
    %v1459 = vsel %vm1424, %v1406, 0
    %v1462 = vsel %vm1424, %v1407, 0
    %v1465 = vsel %vm1424, %v1408, 0
    %v1468 = vsel %vm1424, %v1409, 0
    %v1471 = vsel %vm1424, %v1410, 0
    %1473 = vmatprep.subr.mxu0 0.0
    %1474 = vmatpush1.msra.mxu0 0.0
    %1475 = vmatprep.subr.mxu0 0.0
    %1476 = vmatpush1.msra.mxu0 0.0
    %1477 = vmatprep.subr.mxu0 0.0
    %1478 = vmatpush1.msra.mxu0 0.0
    %1479 = vmatprep.subr.mxu0 0.0
    %1480 = vmatpush1.msra.mxu0 0.0
    %1481 = vmatprep.subr.mxu0 0.0
    %1482 = vmatpush1.msra.mxu0 0.0
    %1483 = vmatprep.subr.mxu0 0.0
    %1484 = vmatpush1.msra.mxu0 0.0
    %1485 = vmatprep.subr.mxu0 0.0
    %1486 = vmatpush1.msra.mxu0 0.0
    %1487 = vmatprep.subr.mxu0 0.0
    %1488 = vmatpush1.msra.mxu0 0.0
    %1489 = vmatprep.subr.mxu0 0.0
    %1490 = vmatpush1.msra.mxu0 0.0
    %1491 = vmatprep.subr.mxu0 0.0
    %1492 = vmatpush1.msra.mxu0 0.0
    %1493 = vmatprep.subr.mxu0 0.0
    %1494 = vmatpush1.msra.mxu0 %v1416
    %1495 = vmatprep.subr.mxu0 0.0
    %1496 = vmatpush1.msra.mxu0 %v1415
    %1497 = vmatprep.subr.mxu0 0.0
    %1498 = vmatpush1.msra.mxu0 %v1414
    %1499 = vmatprep.subr.mxu0 0.0
    %1500 = vmatpush1.msra.mxu0 %v1413
    %1501 = vmatprep.subr.mxu0 0.0
    %1502 = vmatpush1.msra.mxu0 %v1412
    %1503 = vmatprep.subr.mxu0 0.0
    %1504 = vmatpush1.msra.mxu0 %v1411
    %1505 = vmatprep.subr.mxu0 0.0
    %1506 = vmatpush2.msra.mxu0 0.0
    %1507 = vmatprep.subr.mxu0 0.0
    %1508 = vmatpush2.msra.mxu0 0.0
    %1509 = vmatprep.subr.mxu0 0.0
    %1510 = vmatpush2.msra.mxu0 0.0
    %1511 = vmatprep.subr.mxu0 0.0
    %1512 = vmatpush2.msra.mxu0 0.0
    %1513 = vmatprep.subr.mxu0 0.0
    %1514 = vmatpush2.msra.mxu0 0.0
    %1515 = vmatprep.subr.mxu0 0.0
    %1516 = vmatpush2.msra.mxu0 0.0
    %1517 = vmatprep.subr.mxu0 0.0
    %1518 = vmatpush2.msra.mxu0 0.0
    %1519 = vmatprep.subr.mxu0 0.0
    %1520 = vmatpush2.msra.mxu0 0.0
    %1521 = vmatprep.subr.mxu0 0.0
    %1522 = vmatpush2.msra.mxu0 0.0
    %1523 = vmatprep.subr.mxu0 0.0
    %1524 = vmatpush2.msra.mxu0 0.0
    %1525 = vmatprep.subr.mxu0 0.0
    %1526 = vmatpush2.msra.mxu0 0.0
    %1527 = vmatprep.subr.mxu0 0.0
    %1528 = vmatpush2.msra.mxu0 0.0
    %1529 = vmatprep.subr.mxu0 0.0
    %1530 = vmatpush2.msra.mxu0 0.0
    %1531 = vmatprep.subr.mxu0 0.0
    %1532 = vmatpush2.msra.mxu0 0.0
    %1533 = vmatprep.subr.mxu0 0.0
    %1534 = vmatpush2.msra.mxu0 0.0
    %1535 = vmatprep.subr.mxu0 0.0
    %1536 = vmatpush2.msra.mxu0 0.0
    %1537 = vmatprep.mubr.f32.mxu0 0.0
    %1538 = vmatmul.mubr.f32.gmra.mxu0 %v1426
    %v1539 = vpop.f32.mrf.mxu0
    %v1540 = vadd.f32 %v1422, %v1539
    %v1541 = vpop.f32.mrf.mxu0
    %1542 = vmatprep.mubr.f32.mxu0 0.0
    %1543 = vmatmul.mubr.f32.gmra.mxu0 %v1429
    %v1544 = vpop.f32.mrf.mxu0
    %v1545 = vadd.f32 %v1422, %v1544
    %v1546 = vpop.f32.mrf.mxu0
    %1547 = vmatprep.mubr.f32.mxu0 0.0
    %1548 = vmatmul.mubr.f32.gmra.mxu0 %v1432
    %v1549 = vpop.f32.mrf.mxu0
    %v1550 = vadd.f32 %v1422, %v1549
    %v1551 = vpop.f32.mrf.mxu0
    %1552 = vmatprep.mubr.f32.mxu0 0.0
    %1553 = vmatmul.mubr.f32.gmra.mxu0 %v1435
    %v1554 = vpop.f32.mrf.mxu0
    %v1555 = vadd.f32 %v1422, %v1554
    %v1556 = vpop.f32.mrf.mxu0
    %1557 = vmatprep.mubr.f32.mxu0 0.0
    %1558 = vmatmul.mubr.f32.gmra.mxu0 %v1438
    %v1559 = vpop.f32.mrf.mxu0
    %v1560 = vadd.f32 %v1422, %v1559
    %v1561 = vpop.f32.mrf.mxu0
    %1562 = vmatprep.mubr.f32.mxu0 0.0
    %1563 = vmatmul.mubr.f32.gmra.mxu0 %v1441
    %v1564 = vpop.f32.mrf.mxu0
    %v1565 = vadd.f32 %v1422, %v1564
    %v1566 = vpop.f32.mrf.mxu0
    %1567 = vmatprep.mubr.f32.mxu0 0.0
    %1568 = vmatmul.mubr.f32.gmra.mxu0 %v1444
    %v1569 = vpop.f32.mrf.mxu0
    %v1570 = vadd.f32 %v1422, %v1569
    %v1571 = vpop.f32.mrf.mxu0
    %1572 = vmatprep.mubr.f32.mxu0 0.0
    %1573 = vmatmul.mubr.f32.gmra.mxu0 %v1447
    %v1574 = vpop.f32.mrf.mxu0
    %v1575 = vadd.f32 %v1422, %v1574
    %v1576 = vpop.f32.mrf.mxu0
    %1577 = vmatprep.mubr.f32.mxu0 0.0
    %1578 = vmatmul.mubr.f32.gmra.mxu0 %v1450
    %v1579 = vpop.f32.mrf.mxu0
    %v1580 = vadd.f32 %v1422, %v1579
    %v1581 = vpop.f32.mrf.mxu0
    %1582 = vmatprep.mubr.f32.mxu0 0.0
    %1583 = vmatmul.mubr.f32.gmra.mxu0 %v1453
    %v1584 = vpop.f32.mrf.mxu0
    %v1585 = vadd.f32 %v1422, %v1584
    %v1586 = vpop.f32.mrf.mxu0
    %1587 = vmatprep.mubr.f32.mxu0 0.0
    %1588 = vmatmul.mubr.f32.gmra.mxu0 %v1456
    %v1589 = vpop.f32.mrf.mxu0
    %v1590 = vadd.f32 %v1422, %v1589
    %v1591 = vpop.f32.mrf.mxu0
    %1592 = vmatprep.mubr.f32.mxu0 0.0
    %1593 = vmatmul.mubr.f32.gmra.mxu0 %v1459
    %v1594 = vpop.f32.mrf.mxu0
    %v1595 = vadd.f32 %v1422, %v1594
    %v1596 = vpop.f32.mrf.mxu0
    %1597 = vmatprep.mubr.f32.mxu0 0.0
    %1598 = vmatmul.mubr.f32.gmra.mxu0 %v1462
    %v1599 = vpop.f32.mrf.mxu0
    %v1600 = vadd.f32 %v1422, %v1599
    %v1601 = vpop.f32.mrf.mxu0
    %1602 = vmatprep.mubr.f32.mxu0 0.0
    %1603 = vmatmul.mubr.f32.gmra.mxu0 %v1465
    %v1604 = vpop.f32.mrf.mxu0
    %v1605 = vadd.f32 %v1422, %v1604
    %v1606 = vpop.f32.mrf.mxu0
    %1607 = vmatprep.mubr.f32.mxu0 0.0
    %1608 = vmatmul.mubr.f32.gmra.mxu0 %v1468
    %v1609 = vpop.f32.mrf.mxu0
    %v1610 = vadd.f32 %v1422, %v1609
    %v1611 = vpop.f32.mrf.mxu0
    %1612 = vmatprep.mubr.f32.mxu0 0.0
    %1613 = vmatmul.mubr.f32.gmra.mxu0 %v1471
    %v1614 = vpop.f32.mrf.mxu0
    %v1615 = vadd.f32 %v1422, %v1614
    %v1616 = vpop.f32.mrf.mxu0
    %1617 = vdwg.mxu0
    %v1618 = vmax.f32 %v1540, 0.0
    %v1619 = vmax.f32 %v1545, 0.0
    %v1620 = vmax.f32 %v1550, 0.0
    %v1621 = vmax.f32 %v1555, 0.0
    %v1622 = vmax.f32 %v1560, 0.0
    %v1623 = vmax.f32 %v1565, 0.0
    %v1624 = vmax.f32 %v1570, 0.0
    %v1625 = vmax.f32 %v1575, 0.0
    %v1626 = vmax.f32 %v1580, 0.0
    %v1627 = vmax.f32 %v1585, 0.0
    %v1628 = vmax.f32 %v1590, 0.0
    %v1629 = vmax.f32 %v1595, 0.0
    %v1630 = vmax.f32 %v1600, 0.0
    %v1631 = vmax.f32 %v1605, 0.0
    %v1632 = vmax.f32 %v1610, 0.0
    %v1633 = vmax.f32 %v1615, 0.0
    %1634 = vst.msk [vmem:[#allocation3] sm:$0xff] %vm868, %v1618
    %1635 = vst.msk [vmem:[#allocation3 + $0x8] sm:$0xff] %vm868, %v1619
    %1636 = vst.msk [vmem:[#allocation3 + $0x10] sm:$0xff] %vm868, %v1620
    %1637 = vst.msk [vmem:[#allocation3 + $0x18] sm:$0xff] %vm868, %v1621
    %1638 = vst.msk [vmem:[#allocation3 + $0x20] sm:$0xff] %vm868, %v1622
    %1639 = vst.msk [vmem:[#allocation3 + $0x28] sm:$0xff] %vm868, %v1623
    %1640 = vst.msk [vmem:[#allocation3 + $0x30] sm:$0xff] %vm868, %v1624
    %1641 = vst.msk [vmem:[#allocation3 + $0x38] sm:$0xff] %vm868, %v1625
    %1642 = vst.msk [vmem:[#allocation3 + $0x40] sm:$0xff] %vm868, %v1626
    %1643 = vst.msk [vmem:[#allocation3 + $0x48] sm:$0xff] %vm868, %v1627
    %1644 = vst.msk [vmem:[#allocation3 + $0x50] sm:$0xff] %vm868, %v1628
    %1645 = vst.msk [vmem:[#allocation3 + $0x58] sm:$0xff] %vm868, %v1629
    %1646 = vst.msk [vmem:[#allocation3 + $0x60] sm:$0xff] %vm868, %v1630
    %1647 = vst.msk [vmem:[#allocation3 + $0x68] sm:$0xff] %vm868, %v1631
    %1648 = vst.msk [vmem:[#allocation3 + $0x70] sm:$0xff] %vm868, %v1632
    %1649 = vst.msk [vmem:[#allocation3 + $0x78] sm:$0xff] %vm868, %v1633
    // Predicated region
    $region30: #{tpu_custom_call.1} parent=1 // pred_check
      _
    $region31: #{tpu_custom_call.1} parent=1 // pred_check_branch
      %1651 = sbr.rel (0) target = $region33
    $region32: #{tpu_custom_call.1} parent=1 // pred_region
      %s1653 = ssub.s32 2048, 2048
      %1654 = vsyncadd [#allocation4], %s1653
      %s1655 = sshll.u32 [#allocation3], 4
      %s1656 = int_to_ptr.vmem [resolvable:$true] %s1655
      %1661 = dma.vmem_to_hbm [thread:$0]  %s1656, 2048, %s7, [#allocation4], 128, 128, 8
    $region33: #{tpu_custom_call.1} parent=1 // pred_fallthru
      _
    // Predicated region
    $region34: #{tpu_custom_call.1} parent=1 // pred_check
      _
    $region35: #{tpu_custom_call.1} parent=1 // pred_check_branch
      %1663 = sbr.rel (0) target = $region37
    $region36: #{tpu_custom_call.1} parent=1 // pred_region
      %1664 = dma.done [#allocation4], 2048
    $region37: #{tpu_custom_call.1} parent=1 // pred_fallthru
      _
    %1665 = vsyncpa [#allocation4], 1

</llo_original>
